<compile_context>
chip_gen: v7x
topology: tpu7x:2x2x1
jax: 0.10.0
libtpu: 0.0.40
codegen_flags: <defaults>
</compile_context>

<pallas_src>
import functools

import jax
import jax.numpy as jnp
from jax import lax
from jax.experimental import pallas as pl
from jax.experimental.pallas import tpu as pltpu


def _round_up(x, m):
    return ((x + m - 1) // m) * m


# ----------------------------------------------------------------------------
# Kernel: one batch tile of pair embeddings -> lane-dense (1, TB) score row.
# ----------------------------------------------------------------------------
def _scorer_kernel(xi_ref, xa_ref, xf_ref,
                   w1i_ref, w1a_ref, w1f_ref, w2_ref, b2_ref, o_ref):
    # first_layer as a sum of three MXU passes against the pre-split W1^T
    # slabs; b1 is folded into the last row of w1_f (paired with the trailing
    # ones column of xf), so there is no separate bias add.
    h = jnp.dot(xi_ref[...], w1i_ref[...], preferred_element_type=jnp.float32)
    h = h + jnp.dot(xa_ref[...], w1a_ref[...], preferred_element_type=jnp.float32)
    h = h + jnp.dot(xf_ref[...], w1f_ref[...], preferred_element_type=jnp.float32)
    h = jnp.maximum(h, 0.0)                                   # ReLU on the VPU

    # second_layer, lane-dense: (1, H) x (TB, H)^T -> (1, TB).  Tiny
    # rhs-transposed MXU pass; the (1, TB) row stores with unmasked vst
    # instead of ~TB/8 masked 1-lane stores.
    scores = lax.dot_general(
        w2_ref[...], h, (((1,), (1,)), ((), ())),
        preferred_element_type=jnp.float32,
    )
    o_ref[...] = (scores + b2_ref[0]).astype(o_ref.dtype)     # b2 scalar from SMEM


# ----------------------------------------------------------------------------
# One-time parameter preparation (hoisted out of the per-call hot path).
# ----------------------------------------------------------------------------
def prepare_params(raw):
    """Split/transpose the PyTorch-style parameters once; fold b1 into W1."""
    W1 = raw["W1"].astype(jnp.float32)                       # (H, D) first_layer.weight
    b1 = raw["b1"].astype(jnp.float32)                       # (H,)
    feat_on = raw["feat_on"].astype(jnp.float32)              # (F, E)
    feat_off = raw["feat_off"].astype(jnp.float32)            # (F, E)
    F, E = feat_on.shape
    H, D = W1.shape
    M = (D - F * E) // 2                                      # mark_embedding_dim
    # Concat order in the PyTorch forward: [emb_i, emb_a, feat_flat].
    w1_i = W1[:, :M].T                                        # (M, H)
    w1_a = W1[:, M:2 * M].T                                   # (M, H)
    # Feature slab gets one extra row = b1 (pairs with the ones column of xf).
    w1_f = jnp.concatenate([W1[:, 2 * M:].T, b1[None, :]], axis=0)  # (F*E+1, H)
    return {
        "w1_i": w1_i,
        "w1_a": w1_a,
        "w1_f": w1_f,
        "w2_row": raw["W2"].reshape(1, H).astype(jnp.float32),  # (1, H)  resident VMEM
        "b2": raw["b2"].reshape(1).astype(jnp.float32),          # (1,)    SMEM scalar
        "feat_on": feat_on,
        "feat_off": feat_off,
    }


def _tile_batch(B, cap):
    """Pick (tb, Bp, n_tiles): exact single tile when possible, else 128-aligned."""
    Bp8 = _round_up(max(B, 8), 8)
    if Bp8 <= cap:
        return Bp8, Bp8, 1                       # one exactly-sized tile, grid=(1,)
    n_tiles = pl.cdiv(Bp8, cap)
    tb = _round_up(pl.cdiv(Bp8, n_tiles), 128)   # lane-dense output blocks need 128-mult
    return tb, tb * n_tiles, n_tiles


# ----------------------------------------------------------------------------
# Batched forward: scores B candidate pairs in one pallas_call.
# ----------------------------------------------------------------------------
@functools.partial(jax.jit, static_argnames=("tile_cap",))
def sequential_scorer_batched(emb_i, emb_a, pos_mask, prepared, tile_cap=2048):
    """
    emb_i, emb_a : (B, mark_embedding_dim) float32
    pos_mask     : (B, num_feats) bool  -- True where feat_set[k] in pos_feats
    prepared     : output of prepare_params()
    returns      : (B, 1) float32 scores
    """
    B, M = emb_i.shape
    feat_on, feat_off = prepared["feat_on"], prepared["feat_off"]
    F, E = feat_on.shape
    H = prepared["w2_row"].shape[1]

    # Feature-embedding select (same ordering as the PyTorch loop) plus a
    # trailing ones column that pairs with the folded-b1 row of w1_f.  This
    # small (B, F*E+1) slab is the only activation written back to HBM; the
    # markable embeddings stream straight from their existing HBM buffers.
    feat = jnp.where(pos_mask[:, :, None], feat_on[None], feat_off[None])
    xf = jnp.concatenate(
        [feat.reshape(B, F * E).astype(jnp.float32), jnp.ones((B, 1), jnp.float32)],
        axis=-1,
    )                                                          # (B, F*E+1)
    xi = emb_i.astype(jnp.float32)
    xa = emb_a.astype(jnp.float32)

    tb, Bp, n_tiles = _tile_batch(B, tile_cap)
    if Bp != B:
        pad = ((0, Bp - B), (0, 0))
        xi, xa, xf = (jnp.pad(a, pad) for a in (xi, xa, xf))   # padded rows sliced off

    out = pl.pallas_call(
        _scorer_kernel,
        out_shape=jax.ShapeDtypeStruct((1, Bp), jnp.float32),  # lane-dense score row
        grid=(n_tiles,),
        in_specs=[
            pl.BlockSpec((tb, M), lambda b: (b, 0)),           # emb_i tiles (streamed)
            pl.BlockSpec((tb, M), lambda b: (b, 0)),           # emb_a tiles (streamed)
            pl.BlockSpec((tb, F * E + 1), lambda b: (b, 0)),   # feature slab tiles
            pl.BlockSpec((M, H), lambda b: (0, 0)),            # W1_i^T (resident)
            pl.BlockSpec((M, H), lambda b: (0, 0)),            # W1_a^T (resident)
            pl.BlockSpec((F * E + 1, H), lambda b: (0, 0)),    # W1_f^T + b1 row (resident)
            pl.BlockSpec((1, H), lambda b: (0, 0)),            # W2 row (resident)
            pl.BlockSpec(memory_space=pltpu.MemorySpace.SMEM), # b2 scalar
        ],
        out_specs=pl.BlockSpec((1, tb), lambda b: (0, b)),
        compiler_params=pltpu.CompilerParams(
            # Batch axis is independent; shards across TCs on v7x when grid > 1.
            dimension_semantics=("parallel",),
        ),
    )(xi, xa, xf,
      prepared["w1_i"], prepared["w1_a"], prepared["w1_f"],
      prepared["w2_row"], prepared["b2"])

    return out[0, :B].reshape(B, 1)


# ----------------------------------------------------------------------------
# Single-pair forward (matches SequentialScorer.forward); pure fused JAX.
# A (1, D) problem is far below pallas_call fixed overhead (per review).
# ----------------------------------------------------------------------------
@jax.jit
def sequential_scorer_forward(emb_i, emb_a, pos_mask, prepared):
    feat = jnp.where(pos_mask[:, None], prepared["feat_on"], prepared["feat_off"])
    x = jnp.concatenate(
        [emb_i.astype(jnp.float32), emb_a.astype(jnp.float32),
         feat.reshape(-1), jnp.ones((1,), jnp.float32)]
    )
    w1 = jnp.concatenate(
        [prepared["w1_i"], prepared["w1_a"], prepared["w1_f"]], axis=0
    )                                                          # (D+1, H), b1 folded
    h = jnp.maximum(x @ w1, 0.0)
    return (h @ prepared["w2_row"][0] + prepared["b2"][0]).reshape(1, 1)


# ----------------------------------------------------------------------------
# Deterministic synthetic parameters (nn.Embedding ~ N(0,1); nn.Linear ~ U).
# ----------------------------------------------------------------------------
def make_params(key, num_feats, feat_emb_dim, mark_embedding_dim, hidden_dim):
    D = num_feats * feat_emb_dim + 2 * mark_embedding_dim
    ks = jax.random.split(key, 6)
    lim1 = 1.0 / jnp.sqrt(D)
    lim2 = 1.0 / jnp.sqrt(hidden_dim)
    return {
        "feat_on": jax.random.normal(ks[0], (num_feats, feat_emb_dim), jnp.float32),
        "feat_off": jax.random.normal(ks[1], (num_feats, feat_emb_dim), jnp.float32),
        "W1": jax.random.uniform(ks[2], (hidden_dim, D), jnp.float32, -lim1, lim1),
        "b1": jax.random.uniform(ks[3], (hidden_dim,), jnp.float32, -lim1, lim1),
        "W2": jax.random.uniform(ks[4], (1, hidden_dim), jnp.float32, -lim2, lim2),
        "b2": jax.random.uniform(ks[5], (1,), jnp.float32, -lim2, lim2),
    }


if __name__ == "__main__":
    # Shapes consistent with the module's __init__.
    mark_embedding_dim = 32
    feat_emb_dim = 8
    hidden_dim = 32
    feat_set = ["exact-match", "same-gender", "string-overlap", "new-entity"]
    num_feats = len(feat_set)

    key = jax.random.PRNGKey(0)
    k_params, k_i, k_a, k_m = jax.random.split(key, 4)

    raw = make_params(k_params, num_feats, feat_emb_dim, mark_embedding_dim, hidden_dim)
    prepared = prepare_params(raw)

    # A batch of candidate (markable, antecedent) pairs, as score_instance would build.
    B = 600
    emb_i = jax.random.normal(k_i, (B, mark_embedding_dim), jnp.float32)
    emb_a = jax.random.normal(k_a, (B, mark_embedding_dim), jnp.float32)
    pos_mask = jax.random.bernoulli(k_m, 0.5, (B, num_feats))

    # Single exactly-sized tile (grid=(1,), tb=600).
    scores = jax.block_until_ready(
        sequential_scorer_batched(emb_i, emb_a, pos_mask, prepared))

    # Pure-JAX reference (same math as the PyTorch module, no Pallas).
    feat_vec = jnp.where(pos_mask[:, :, None], raw["feat_on"][None], raw["feat_off"][None])
    concat = jnp.concatenate([emb_i, emb_a, feat_vec.reshape(B, -1)], axis=-1)
    h_ref = jnp.maximum(concat @ raw["W1"].T + raw["b1"], 0.0)
    ref = h_ref @ raw["W2"].T + raw["b2"]                      # (B, 1)

    assert scores.shape == (B, 1)
    assert jnp.allclose(scores, ref, atol=1e-4, rtol=1e-4), float(
        jnp.max(jnp.abs(scores - ref)))

    # Multi-tile path (grid > 1, 128-aligned tiles, padded batch rows sliced off).
    scores_mt = jax.block_until_ready(
        sequential_scorer_batched(emb_i, emb_a, pos_mask, prepared, tile_cap=256))
    assert jnp.allclose(scores_mt, ref, atol=1e-4, rtol=1e-4), float(
        jnp.max(jnp.abs(scores_mt - ref)))

    # Single-pair path (the original module's forward signature), pure JAX.
    s0 = jax.block_until_ready(
        sequential_scorer_forward(emb_i[0], emb_a[0], pos_mask[0], prepared))
    assert s0.shape == (1, 1)
    assert jnp.allclose(s0, ref[0:1], atol=1e-4, rtol=1e-4)

    print("KERNEL_OK")
</pallas_src>

<mosaic_0001>
module attributes {stable_mosaic.version = 11 : i64} {
  func.func @_scorer_kernel(%arg0: i32, %arg1: memref<600x32xf32, #tpu.memory_space<vmem>>, %arg2: memref<600x32xf32, #tpu.memory_space<vmem>>, %arg3: memref<600x33xf32, #tpu.memory_space<vmem>>, %arg4: memref<32x32xf32, #tpu.memory_space<vmem>>, %arg5: memref<32x32xf32, #tpu.memory_space<vmem>>, %arg6: memref<33x32xf32, #tpu.memory_space<vmem>>, %arg7: memref<1x32xf32, #tpu.memory_space<vmem>>, %arg8: memref<1xf32, #tpu.memory_space<smem>>, %arg9: memref<1x600xf32, #tpu.memory_space<vmem>>) attributes {dimension_semantics = [#tpu.dimension_semantics<parallel>], iteration_bounds = array<i64: 1>, scalar_prefetch = 0 : i64, scratch_operands = 0 : i64, tpu.core_type = #tpu.core_type<tc>, window_params = [{transform_indices = @transform_0, window_bounds = array<i64: 600, 32>}, {transform_indices = @transform_1, window_bounds = array<i64: 600, 32>}, {transform_indices = @transform_2, window_bounds = array<i64: 600, 33>}, {pipeline_mode = #tpu.pipeline_mode<synchronous>, transform_indices = @transform_3, window_bounds = array<i64: 32, 32>}, {pipeline_mode = #tpu.pipeline_mode<synchronous>, transform_indices = @transform_4, window_bounds = array<i64: 32, 32>}, {pipeline_mode = #tpu.pipeline_mode<synchronous>, transform_indices = @transform_5, window_bounds = array<i64: 33, 32>}, {pipeline_mode = #tpu.pipeline_mode<synchronous>, transform_indices = @transform_6, window_bounds = array<i64: 1, 32>}, {transform_indices = @transform_7, window_bounds = array<i64: 1>}, {transform_indices = @transform_8, window_bounds = array<i64: 1, 600>}]} {
    %c0 = arith.constant 0 : index
    %c0_0 = arith.constant 0 : index
    %0 = vector.load %arg1[%c0, %c0_0] : memref<600x32xf32, #tpu.memory_space<vmem>>, vector<600x32xf32>
    %c0_1 = arith.constant 0 : index
    %c0_2 = arith.constant 0 : index
    %1 = vector.load %arg4[%c0_1, %c0_2] : memref<32x32xf32, #tpu.memory_space<vmem>>, vector<32x32xf32>
    %cst = arith.constant dense<0.000000e+00> : vector<600x32xf32>
    %2 = tpu.matmul %0, %1, %cst {dimension_numbers = #tpu.dot_dimension_numbers<[1], [0], [0], [1], [0, 0, 1, 1], [], []>} : vector<600x32xf32>, vector<32x32xf32>, vector<600x32xf32> -> vector<600x32xf32>
    %c0_3 = arith.constant 0 : index
    %c0_4 = arith.constant 0 : index
    %3 = vector.load %arg2[%c0_3, %c0_4] : memref<600x32xf32, #tpu.memory_space<vmem>>, vector<600x32xf32>
    %c0_5 = arith.constant 0 : index
    %c0_6 = arith.constant 0 : index
    %4 = vector.load %arg5[%c0_5, %c0_6] : memref<32x32xf32, #tpu.memory_space<vmem>>, vector<32x32xf32>
    %cst_7 = arith.constant dense<0.000000e+00> : vector<600x32xf32>
    %5 = tpu.matmul %3, %4, %cst_7 {dimension_numbers = #tpu.dot_dimension_numbers<[1], [0], [0], [1], [0, 0, 1, 1], [], []>} : vector<600x32xf32>, vector<32x32xf32>, vector<600x32xf32> -> vector<600x32xf32>
    %6 = arith.addf %2, %5 : vector<600x32xf32>
    %c0_8 = arith.constant 0 : index
    %c0_9 = arith.constant 0 : index
    %7 = vector.load %arg3[%c0_8, %c0_9] : memref<600x33xf32, #tpu.memory_space<vmem>>, vector<600x33xf32>
    %c0_10 = arith.constant 0 : index
    %c0_11 = arith.constant 0 : index
    %8 = vector.load %arg6[%c0_10, %c0_11] : memref<33x32xf32, #tpu.memory_space<vmem>>, vector<33x32xf32>
    %cst_12 = arith.constant dense<0.000000e+00> : vector<600x32xf32>
    %9 = tpu.matmul %7, %8, %cst_12 {dimension_numbers = #tpu.dot_dimension_numbers<[1], [0], [0], [1], [0, 0, 1, 1], [], []>} : vector<600x33xf32>, vector<33x32xf32>, vector<600x32xf32> -> vector<600x32xf32>
    %10 = arith.addf %6, %9 : vector<600x32xf32>
    %cst_13 = arith.constant 0.000000e+00 : f32
    %11 = vector.broadcast %cst_13 : f32 to vector<600x32xf32>
    %12 = arith.maximumf %10, %11 : vector<600x32xf32>
    %c0_14 = arith.constant 0 : index
    %c0_15 = arith.constant 0 : index
    %13 = vector.load %arg7[%c0_14, %c0_15] : memref<1x32xf32, #tpu.memory_space<vmem>>, vector<1x32xf32>
    %cst_16 = arith.constant dense<0.000000e+00> : vector<1x600xf32>
    %14 = tpu.matmul %13, %12, %cst_16 {dimension_numbers = #tpu.dot_dimension_numbers<[1], [1], [0], [0], [0, 0, 1, 0], [], []>} : vector<1x32xf32>, vector<600x32xf32>, vector<1x600xf32> -> vector<1x600xf32>
    %c0_17 = arith.constant 0 : index
    %15 = memref.load %arg8[%c0_17] : memref<1xf32, #tpu.memory_space<smem>>
    %16 = vector.broadcast %15 : f32 to vector<1x600xf32>
    %17 = arith.addf %14, %16 : vector<1x600xf32>
    %c0_18 = arith.constant 0 : index
    %c0_19 = arith.constant 0 : index
    %18 = vector.load %arg9[%c0_18, %c0_19] : memref<1x600xf32, #tpu.memory_space<vmem>>, vector<1x600xf32>
    tpu.vector_store %arg9[%c0_18, %c0_19], %17 {strides = array<i32>} : memref<1x600xf32, #tpu.memory_space<vmem>>, vector<1x600xf32>,
    return
  }
  func.func @transform_0(%arg0: i32) -> (i32, i32) {
    %c0_i32 = arith.constant 0 : i32
    %c0_i32_0 = arith.constant 0 : i32
    return %arg0, %c0_i32 : i32, i32
  }
  func.func @transform_1(%arg0: i32) -> (i32, i32) {
    %c0_i32 = arith.constant 0 : i32
    %c0_i32_0 = arith.constant 0 : i32
    return %arg0, %c0_i32 : i32, i32
  }
  func.func @transform_2(%arg0: i32) -> (i32, i32) {
    %c0_i32 = arith.constant 0 : i32
    %c0_i32_0 = arith.constant 0 : i32
    return %arg0, %c0_i32 : i32, i32
  }
  func.func @transform_3(%arg0: i32) -> (i32, i32) {
    %c0_i32 = arith.constant 0 : i32
    %c0_i32_0 = arith.constant 0 : i32
    %c0_i32_1 = arith.constant 0 : i32
    return %c0_i32, %c0_i32_0 : i32, i32
  }
  func.func @transform_4(%arg0: i32) -> (i32, i32) {
    %c0_i32 = arith.constant 0 : i32
    %c0_i32_0 = arith.constant 0 : i32
    %c0_i32_1 = arith.constant 0 : i32
    return %c0_i32, %c0_i32_0 : i32, i32
  }
  func.func @transform_5(%arg0: i32) -> (i32, i32) {
    %c0_i32 = arith.constant 0 : i32
    %c0_i32_0 = arith.constant 0 : i32
    %c0_i32_1 = arith.constant 0 : i32
    return %c0_i32, %c0_i32_0 : i32, i32
  }
  func.func @transform_6(%arg0: i32) -> (i32, i32) {
    %c0_i32 = arith.constant 0 : i32
    %c0_i32_0 = arith.constant 0 : i32
    %c0_i32_1 = arith.constant 0 : i32
    return %c0_i32, %c0_i32_0 : i32, i32
  }
  func.func @transform_7(%arg0: i32) -> i32 {
    %c0_i32 = arith.constant 0 : i32
    %c0_i32_0 = arith.constant 0 : i32
    return %c0_i32 : i32
  }
  func.func @transform_8(%arg0: i32) -> (i32, i32) {
    %c0_i32 = arith.constant 0 : i32
    %c0_i32_0 = arith.constant 0 : i32
    return %c0_i32, %arg0 : i32, i32
  }
}

</mosaic_0001>

<llo_original>
// kernel: sequential_scorer_batched.1
$region0: #{sequential_scorer_batched.1}
  #allocation0 [shape = 'u32[]', space=smem, size = 0x4, offset = 0x4, fixed_abs, tag = 'smem constant byte address 0x4 - core index']
  #allocation1 [shape = 'u32[144,128]{1,0:T(1,128)}', space=vmem, size = 0x12000, scoped, tag = 'internal scratch']
  #allocation2 [shape = 'f32[1]{0:T(128)S(6)}', space=smem, size = 0x200, scoped, tag = 'scoped memory for sequential_scorer_batched.1']
  %s0 = inlined_call_operand.vmem [shape: f32[600,32], index: 0, kind: input, shape index: {}]
  %s1 = inlined_call_operand.vmem [shape: f32[600,32], index: 1, kind: input, shape index: {}]
  %s2 = inlined_call_operand.vmem [shape: f32[600,33], index: 2, kind: input, shape index: {}]
  %s3 = inlined_call_operand.vmem [shape: f32[32,32], index: 3, kind: input, shape index: {}]
  %s4 = inlined_call_operand.vmem [shape: f32[32,32], index: 4, kind: input, shape index: {}]
  %s5 = inlined_call_operand.vmem [shape: f32[33,32], index: 5, kind: input, shape index: {}]
  %s6 = inlined_call_operand.vmem [shape: f32[1,32], index: 6, kind: input, shape index: {}]
  %s7 = inlined_call_operand.<no memory space> [shape: f32[1], index: 7, kind: input, shape index: {}]
  %s8 = inlined_call_operand.hbm [shape: f32[1,600], index: 8, kind: output, shape index: {}]
  %s9 = sld [smem:[#allocation0]]
  $region42: #{sequential_scorer_batched.1} parent=0
    _
  %s11 = ssub.s32 1, %s9
  %s12 = scalar_select 0, %s11, %s9
  %13 = sst [smem:[#allocation2]] %s7
  $region1: #{sequential_scorer_batched.1} parent=0
    #allocation3 [shape = 'u8[2560]{0}', space=vmem, size = 0xc00, scoped, tag = 'output window, operand 0, single buffered']
    #allocation4 [shape = 's32[1]{0}', space=sflag, size = 0x4, scoped, tag = 'scoped memory for sequential_scorer_batched.1']
    %14 = vsyncpa [#allocation4], 0
    // Predicated region
    $region2: #{sequential_scorer_batched.1} parent=1 // pred_check
      _
    $region3: #{sequential_scorer_batched.1} parent=1 // pred_check_branch
      %16 = sbr.rel (0) target = $region5
    $region4: #{sequential_scorer_batched.1} parent=1 // pred_region
      _
    $region5: #{sequential_scorer_batched.1} parent=1 // pred_fallthru
      _
    // Predicated region
    $region6: #{sequential_scorer_batched.1} parent=1 // pred_check
      _
    $region7: #{sequential_scorer_batched.1} parent=1 // pred_check_branch
      %18 = sbr.rel (0) target = $region9
    $region8: #{sequential_scorer_batched.1} parent=1 // pred_region
      _
    $region9: #{sequential_scorer_batched.1} parent=1 // pred_fallthru
      _
    // Predicated region
    $region10: #{sequential_scorer_batched.1} parent=1 // pred_check
      _
    $region11: #{sequential_scorer_batched.1} parent=1 // pred_check_branch
      %20 = sbr.rel (0) target = $region13
    $region12: #{sequential_scorer_batched.1} parent=1 // pred_region
      _
    $region13: #{sequential_scorer_batched.1} parent=1 // pred_fallthru
      _
    // Predicated region
    $region14: #{sequential_scorer_batched.1} parent=1 // pred_check
      _
    $region15: #{sequential_scorer_batched.1} parent=1 // pred_check_branch
      %22 = sbr.rel (0) target = $region17
    $region16: #{sequential_scorer_batched.1} parent=1 // pred_region
      _
    $region17: #{sequential_scorer_batched.1} parent=1 // pred_fallthru
      _
    // Predicated region
    $region18: #{sequential_scorer_batched.1} parent=1 // pred_check
      _
    $region19: #{sequential_scorer_batched.1} parent=1 // pred_check_branch
      %24 = sbr.rel (0) target = $region21
    $region20: #{sequential_scorer_batched.1} parent=1 // pred_region
      _
    $region21: #{sequential_scorer_batched.1} parent=1 // pred_fallthru
      _
    // Predicated region
    $region22: #{sequential_scorer_batched.1} parent=1 // pred_check
      _
    $region23: #{sequential_scorer_batched.1} parent=1 // pred_check_branch
      %26 = sbr.rel (0) target = $region25
    $region24: #{sequential_scorer_batched.1} parent=1 // pred_region
      _
    $region25: #{sequential_scorer_batched.1} parent=1 // pred_fallthru
      _
    // Predicated region
    $region26: #{sequential_scorer_batched.1} parent=1 // pred_check
      _
    $region27: #{sequential_scorer_batched.1} parent=1 // pred_check_branch
      %28 = sbr.rel (0) target = $region29
    $region28: #{sequential_scorer_batched.1} parent=1 // pred_region
      _
    $region29: #{sequential_scorer_batched.1} parent=1 // pred_fallthru
      _
    // Predicated region
    $region30: #{sequential_scorer_batched.1} parent=1 // pred_check
      _
    $region31: #{sequential_scorer_batched.1} parent=1 // pred_check_branch
      %30 = sbr.rel (0) target = $region33
    $region32: #{sequential_scorer_batched.1} parent=1 // pred_region
      _
    $region33: #{sequential_scorer_batched.1} parent=1 // pred_fallthru
      _
    %v31 = vld [vmem:[%s0] sm:$0xff]
    %v32 = vld [vmem:[%s0 + $0x8] sm:$0xff]
    %v33 = vld [vmem:[%s0 + $0x10] sm:$0xff]
    %v34 = vld [vmem:[%s0 + $0x18] sm:$0xff]
    %v35 = vld [vmem:[%s0 + $0x20] sm:$0xff]
    %v36 = vld [vmem:[%s0 + $0x28] sm:$0xff]
    %v37 = vld [vmem:[%s0 + $0x30] sm:$0xff]
    %v38 = vld [vmem:[%s0 + $0x38] sm:$0xff]
    %v39 = vld [vmem:[%s0 + $0x40] sm:$0xff]
    %v40 = vld [vmem:[%s0 + $0x48] sm:$0xff]
    %v41 = vld [vmem:[%s0 + $0x50] sm:$0xff]
    %v42 = vld [vmem:[%s0 + $0x58] sm:$0xff]
    %v43 = vld [vmem:[%s0 + $0x60] sm:$0xff]
    %v44 = vld [vmem:[%s0 + $0x68] sm:$0xff]
    %v45 = vld [vmem:[%s0 + $0x70] sm:$0xff]
    %v46 = vld [vmem:[%s0 + $0x78] sm:$0xff]
    %v47 = vld [vmem:[%s0 + $0x80] sm:$0xff]
    %v48 = vld [vmem:[%s0 + $0x88] sm:$0xff]
    %v49 = vld [vmem:[%s0 + $0x90] sm:$0xff]
    %v50 = vld [vmem:[%s0 + $0x98] sm:$0xff]
    %v51 = vld [vmem:[%s0 + $0xa0] sm:$0xff]
    %v52 = vld [vmem:[%s0 + $0xa8] sm:$0xff]
    %v53 = vld [vmem:[%s0 + $0xb0] sm:$0xff]
    %v54 = vld [vmem:[%s0 + $0xb8] sm:$0xff]
    %v55 = vld [vmem:[%s0 + $0xc0] sm:$0xff]
    %v56 = vld [vmem:[%s0 + $0xc8] sm:$0xff]
    %v57 = vld [vmem:[%s0 + $0xd0] sm:$0xff]
    %v58 = vld [vmem:[%s0 + $0xd8] sm:$0xff]
    %v59 = vld [vmem:[%s0 + $0xe0] sm:$0xff]
    %v60 = vld [vmem:[%s0 + $0xe8] sm:$0xff]
    %v61 = vld [vmem:[%s0 + $0xf0] sm:$0xff]
    %v62 = vld [vmem:[%s0 + $0xf8] sm:$0xff]
    %v63 = vld [vmem:[%s0 + $0x100] sm:$0xff]
    %v64 = vld [vmem:[%s0 + $0x108] sm:$0xff]
    %v65 = vld [vmem:[%s0 + $0x110] sm:$0xff]
    %v66 = vld [vmem:[%s0 + $0x118] sm:$0xff]
    %v67 = vld [vmem:[%s0 + $0x120] sm:$0xff]
    %v68 = vld [vmem:[%s0 + $0x128] sm:$0xff]
    %v69 = vld [vmem:[%s0 + $0x130] sm:$0xff]
    %v70 = vld [vmem:[%s0 + $0x138] sm:$0xff]
    %v71 = vld [vmem:[%s0 + $0x140] sm:$0xff]
    %v72 = vld [vmem:[%s0 + $0x148] sm:$0xff]
    %v73 = vld [vmem:[%s0 + $0x150] sm:$0xff]
    %v74 = vld [vmem:[%s0 + $0x158] sm:$0xff]
    %v75 = vld [vmem:[%s0 + $0x160] sm:$0xff]
    %v76 = vld [vmem:[%s0 + $0x168] sm:$0xff]
    %v77 = vld [vmem:[%s0 + $0x170] sm:$0xff]
    %v78 = vld [vmem:[%s0 + $0x178] sm:$0xff]
    %v79 = vld [vmem:[%s0 + $0x180] sm:$0xff]
    %v80 = vld [vmem:[%s0 + $0x188] sm:$0xff]
    %v81 = vld [vmem:[%s0 + $0x190] sm:$0xff]
    %v82 = vld [vmem:[%s0 + $0x198] sm:$0xff]
    %v83 = vld [vmem:[%s0 + $0x1a0] sm:$0xff]
    %v84 = vld [vmem:[%s0 + $0x1a8] sm:$0xff]
    %v85 = vld [vmem:[%s0 + $0x1b0] sm:$0xff]
    %v86 = vld [vmem:[%s0 + $0x1b8] sm:$0xff]
    %v87 = vld [vmem:[%s0 + $0x1c0] sm:$0xff]
    %v88 = vld [vmem:[%s0 + $0x1c8] sm:$0xff]
    %v89 = vld [vmem:[%s0 + $0x1d0] sm:$0xff]
    %v90 = vld [vmem:[%s0 + $0x1d8] sm:$0xff]
    %v91 = vld [vmem:[%s0 + $0x1e0] sm:$0xff]
    %v92 = vld [vmem:[%s0 + $0x1e8] sm:$0xff]
    %v93 = vld [vmem:[%s0 + $0x1f0] sm:$0xff]
    %v94 = vld [vmem:[%s0 + $0x1f8] sm:$0xff]
    %v95 = vld [vmem:[%s0 + $0x200] sm:$0xff]
    %v96 = vld [vmem:[%s0 + $0x208] sm:$0xff]
    %v97 = vld [vmem:[%s0 + $0x210] sm:$0xff]
    %v98 = vld [vmem:[%s0 + $0x218] sm:$0xff]
    %v99 = vld [vmem:[%s0 + $0x220] sm:$0xff]
    %v100 = vld [vmem:[%s0 + $0x228] sm:$0xff]
    %v101 = vld [vmem:[%s0 + $0x230] sm:$0xff]
    %v102 = vld [vmem:[%s0 + $0x238] sm:$0xff]
    %v103 = vld [vmem:[%s0 + $0x240] sm:$0xff]
    %v104 = vld [vmem:[%s0 + $0x248] sm:$0xff]
    %v105 = vld [vmem:[%s0 + $0x250] sm:$0xff]
    %v106 = vld [vmem:[%s3] sm:$0xff]
    %v107 = vld [vmem:[%s3 + $0x8] sm:$0xff]
    %v108 = vld [vmem:[%s3 + $0x10] sm:$0xff]
    %v109 = vld [vmem:[%s3 + $0x18] sm:$0xff]
    %v110 = vld [vmem:[%s1] sm:$0xff]
    %v111 = vld [vmem:[%s1 + $0x8] sm:$0xff]
    %v112 = vld [vmem:[%s1 + $0x10] sm:$0xff]
    %v113 = vld [vmem:[%s1 + $0x18] sm:$0xff]
    %v114 = vld [vmem:[%s1 + $0x20] sm:$0xff]
    %v115 = vld [vmem:[%s1 + $0x28] sm:$0xff]
    %v116 = vld [vmem:[%s1 + $0x30] sm:$0xff]
    %v117 = vld [vmem:[%s1 + $0x38] sm:$0xff]
    %v118 = vld [vmem:[%s1 + $0x40] sm:$0xff]
    %v119 = vld [vmem:[%s1 + $0x48] sm:$0xff]
    %v120 = vld [vmem:[%s1 + $0x50] sm:$0xff]
    %v121 = vld [vmem:[%s1 + $0x58] sm:$0xff]
    %v122 = vld [vmem:[%s1 + $0x60] sm:$0xff]
    %v123 = vld [vmem:[%s1 + $0x68] sm:$0xff]
    %v124 = vld [vmem:[%s1 + $0x70] sm:$0xff]
    %v125 = vld [vmem:[%s1 + $0x78] sm:$0xff]
    %v126 = vld [vmem:[%s1 + $0x80] sm:$0xff]
    %v127 = vld [vmem:[%s1 + $0x88] sm:$0xff]
    %v128 = vld [vmem:[%s1 + $0x90] sm:$0xff]
    %v129 = vld [vmem:[%s1 + $0x98] sm:$0xff]
    %v130 = vld [vmem:[%s1 + $0xa0] sm:$0xff]
    %v131 = vld [vmem:[%s1 + $0xa8] sm:$0xff]
    %v132 = vld [vmem:[%s1 + $0xb0] sm:$0xff]
    %v133 = vld [vmem:[%s1 + $0xb8] sm:$0xff]
    %v134 = vld [vmem:[%s1 + $0xc0] sm:$0xff]
    %v135 = vld [vmem:[%s1 + $0xc8] sm:$0xff]
    %v136 = vld [vmem:[%s1 + $0xd0] sm:$0xff]
    %v137 = vld [vmem:[%s1 + $0xd8] sm:$0xff]
    %v138 = vld [vmem:[%s1 + $0xe0] sm:$0xff]
    %v139 = vld [vmem:[%s1 + $0xe8] sm:$0xff]
    %v140 = vld [vmem:[%s1 + $0xf0] sm:$0xff]
    %v141 = vld [vmem:[%s1 + $0xf8] sm:$0xff]
    %v142 = vld [vmem:[%s1 + $0x100] sm:$0xff]
    %v143 = vld [vmem:[%s1 + $0x108] sm:$0xff]
    %v144 = vld [vmem:[%s1 + $0x110] sm:$0xff]
    %v145 = vld [vmem:[%s1 + $0x118] sm:$0xff]
    %v146 = vld [vmem:[%s1 + $0x120] sm:$0xff]
    %v147 = vld [vmem:[%s1 + $0x128] sm:$0xff]
    %v148 = vld [vmem:[%s1 + $0x130] sm:$0xff]
    %v149 = vld [vmem:[%s1 + $0x138] sm:$0xff]
    %v150 = vld [vmem:[%s1 + $0x140] sm:$0xff]
    %v151 = vld [vmem:[%s1 + $0x148] sm:$0xff]
    %v152 = vld [vmem:[%s1 + $0x150] sm:$0xff]
    %v153 = vld [vmem:[%s1 + $0x158] sm:$0xff]
    %v154 = vld [vmem:[%s1 + $0x160] sm:$0xff]
    %v155 = vld [vmem:[%s1 + $0x168] sm:$0xff]
    %v156 = vld [vmem:[%s1 + $0x170] sm:$0xff]
    %v157 = vld [vmem:[%s1 + $0x178] sm:$0xff]
    %v158 = vld [vmem:[%s1 + $0x180] sm:$0xff]
    %v159 = vld [vmem:[%s1 + $0x188] sm:$0xff]
    %v160 = vld [vmem:[%s1 + $0x190] sm:$0xff]
    %v161 = vld [vmem:[%s1 + $0x198] sm:$0xff]
    %v162 = vld [vmem:[%s1 + $0x1a0] sm:$0xff]
    %v163 = vld [vmem:[%s1 + $0x1a8] sm:$0xff]
    %v164 = vld [vmem:[%s1 + $0x1b0] sm:$0xff]
    %v165 = vld [vmem:[%s1 + $0x1b8] sm:$0xff]
    %v166 = vld [vmem:[%s1 + $0x1c0] sm:$0xff]
    %v167 = vld [vmem:[%s1 + $0x1c8] sm:$0xff]
    %v168 = vld [vmem:[%s1 + $0x1d0] sm:$0xff]
    %v169 = vld [vmem:[%s1 + $0x1d8] sm:$0xff]
    %v170 = vld [vmem:[%s1 + $0x1e0] sm:$0xff]
    %v171 = vld [vmem:[%s1 + $0x1e8] sm:$0xff]
    %v172 = vld [vmem:[%s1 + $0x1f0] sm:$0xff]
    %v173 = vld [vmem:[%s1 + $0x1f8] sm:$0xff]
    %v174 = vld [vmem:[%s1 + $0x200] sm:$0xff]
    %v175 = vld [vmem:[%s1 + $0x208] sm:$0xff]
    %v176 = vld [vmem:[%s1 + $0x210] sm:$0xff]
    %v177 = vld [vmem:[%s1 + $0x218] sm:$0xff]
    %v178 = vld [vmem:[%s1 + $0x220] sm:$0xff]
    %v179 = vld [vmem:[%s1 + $0x228] sm:$0xff]
    %v180 = vld [vmem:[%s1 + $0x230] sm:$0xff]
    %v181 = vld [vmem:[%s1 + $0x238] sm:$0xff]
    %v182 = vld [vmem:[%s1 + $0x240] sm:$0xff]
    %v183 = vld [vmem:[%s1 + $0x248] sm:$0xff]
    %v184 = vld [vmem:[%s1 + $0x250] sm:$0xff]
    %v185 = vld [vmem:[%s4] sm:$0xff]
    %v186 = vld [vmem:[%s4 + $0x8] sm:$0xff]
    %v187 = vld [vmem:[%s4 + $0x10] sm:$0xff]
    %v188 = vld [vmem:[%s4 + $0x18] sm:$0xff]
    %vm189 = vcmask 261120
    %v191 = vsel %vm189, %v110, 0
    %v194 = vsel %vm189, %v111, 0
    %v197 = vsel %vm189, %v112, 0
    %v200 = vsel %vm189, %v113, 0
    %v203 = vsel %vm189, %v114, 0
    %v206 = vsel %vm189, %v115, 0
    %v209 = vsel %vm189, %v116, 0
    %v212 = vsel %vm189, %v117, 0
    %v215 = vsel %vm189, %v118, 0
    %v218 = vsel %vm189, %v119, 0
    %v221 = vsel %vm189, %v120, 0
    %v224 = vsel %vm189, %v121, 0
    %v227 = vsel %vm189, %v122, 0
    %v230 = vsel %vm189, %v123, 0
    %v233 = vsel %vm189, %v124, 0
    %v236 = vsel %vm189, %v125, 0
    %v239 = vsel %vm189, %v126, 0
    %v242 = vsel %vm189, %v127, 0
    %v245 = vsel %vm189, %v128, 0
    %v248 = vsel %vm189, %v129, 0
    %v251 = vsel %vm189, %v130, 0
    %v254 = vsel %vm189, %v131, 0
    %v257 = vsel %vm189, %v132, 0
    %v260 = vsel %vm189, %v133, 0
    %v263 = vsel %vm189, %v134, 0
    %v266 = vsel %vm189, %v135, 0
    %v269 = vsel %vm189, %v136, 0
    %v272 = vsel %vm189, %v137, 0
    %v275 = vsel %vm189, %v138, 0
    %v278 = vsel %vm189, %v139, 0
    %v281 = vsel %vm189, %v140, 0
    %v284 = vsel %vm189, %v141, 0
    %v287 = vsel %vm189, %v142, 0
    %v290 = vsel %vm189, %v143, 0
    %v293 = vsel %vm189, %v144, 0
    %v296 = vsel %vm189, %v145, 0
    %v299 = vsel %vm189, %v146, 0
    %v302 = vsel %vm189, %v147, 0
    %v305 = vsel %vm189, %v148, 0
    %v308 = vsel %vm189, %v149, 0
    %v311 = vsel %vm189, %v150, 0
    %v314 = vsel %vm189, %v151, 0
    %v317 = vsel %vm189, %v152, 0
    %v320 = vsel %vm189, %v153, 0
    %v323 = vsel %vm189, %v154, 0
    %v326 = vsel %vm189, %v155, 0
    %v329 = vsel %vm189, %v156, 0
    %v332 = vsel %vm189, %v157, 0
    %v335 = vsel %vm189, %v158, 0
    %v338 = vsel %vm189, %v159, 0
    %v341 = vsel %vm189, %v160, 0
    %v344 = vsel %vm189, %v161, 0
    %v347 = vsel %vm189, %v162, 0
    %v350 = vsel %vm189, %v163, 0
    %v353 = vsel %vm189, %v164, 0
    %v356 = vsel %vm189, %v165, 0
    %v359 = vsel %vm189, %v166, 0
    %v362 = vsel %vm189, %v167, 0
    %v365 = vsel %vm189, %v168, 0
    %v368 = vsel %vm189, %v169, 0
    %v371 = vsel %vm189, %v170, 0
    %v374 = vsel %vm189, %v171, 0
    %v377 = vsel %vm189, %v172, 0
    %v380 = vsel %vm189, %v173, 0
    %v383 = vsel %vm189, %v174, 0
    %v386 = vsel %vm189, %v175, 0
    %v389 = vsel %vm189, %v176, 0
    %v392 = vsel %vm189, %v177, 0
    %v395 = vsel %vm189, %v178, 0
    %v398 = vsel %vm189, %v179, 0
    %v401 = vsel %vm189, %v180, 0
    %v404 = vsel %vm189, %v181, 0
    %v407 = vsel %vm189, %v182, 0
    %v410 = vsel %vm189, %v183, 0
    %v413 = vsel %vm189, %v184, 0
    %415 = vmatprep.subr.mxu0 0.0
    %416 = vmatpush1.msra.mxu0 %v185
    %417 = vmatprep.subr.mxu0 0.0
    %418 = vmatpush1.msra.mxu0 %v186
    %419 = vmatprep.subr.mxu0 0.0
    %420 = vmatpush1.msra.mxu0 %v187
    %421 = vmatprep.subr.mxu0 0.0
    %422 = vmatpush1.msra.mxu0 %v188
    %423 = vmatprep.subr.mxu0 0.0
    %424 = vmatpush1.msra.mxu0 0.0
    %425 = vmatprep.subr.mxu0 0.0
    %426 = vmatpush1.msra.mxu0 0.0
    %427 = vmatprep.subr.mxu0 0.0
    %428 = vmatpush1.msra.mxu0 0.0
    %429 = vmatprep.subr.mxu0 0.0
    %430 = vmatpush1.msra.mxu0 0.0
    %431 = vmatprep.subr.mxu0 0.0
    %432 = vmatpush1.msra.mxu0 0.0
    %433 = vmatprep.subr.mxu0 0.0
    %434 = vmatpush1.msra.mxu0 0.0
    %435 = vmatprep.subr.mxu0 0.0
    %436 = vmatpush1.msra.mxu0 0.0
    %437 = vmatprep.subr.mxu0 0.0
    %438 = vmatpush1.msra.mxu0 0.0
    %439 = vmatprep.subr.mxu0 0.0
    %440 = vmatpush1.msra.mxu0 0.0
    %441 = vmatprep.subr.mxu0 0.0
    %442 = vmatpush1.msra.mxu0 0.0
    %443 = vmatprep.subr.mxu0 0.0
    %444 = vmatpush1.msra.mxu0 0.0
    %445 = vmatprep.subr.mxu0 0.0
    %446 = vmatpush1.msra.mxu0 0.0
    %447 = vmatprep.subr.mxu0 0.0
    %448 = vmatpush1.msra.mxu0 0.0
    %449 = vmatprep.subr.mxu0 0.0
    %450 = vmatpush1.msra.mxu0 0.0
    %451 = vmatprep.subr.mxu0 0.0
    %452 = vmatpush1.msra.mxu0 0.0
    %453 = vmatprep.subr.mxu0 0.0
    %454 = vmatpush1.msra.mxu0 0.0
    %455 = vmatprep.subr.mxu0 0.0
    %456 = vmatpush1.msra.mxu0 0.0
    %457 = vmatprep.subr.mxu0 0.0
    %458 = vmatpush1.msra.mxu0 0.0
    %459 = vmatprep.subr.mxu0 0.0
    %460 = vmatpush1.msra.mxu0 0.0
    %461 = vmatprep.subr.mxu0 0.0
    %462 = vmatpush1.msra.mxu0 0.0
    %463 = vmatprep.subr.mxu0 0.0
    %464 = vmatpush1.msra.mxu0 0.0
    %465 = vmatprep.subr.mxu0 0.0
    %466 = vmatpush1.msra.mxu0 0.0
    %467 = vmatprep.subr.mxu0 0.0
    %468 = vmatpush1.msra.mxu0 0.0
    %469 = vmatprep.subr.mxu0 0.0
    %470 = vmatpush1.msra.mxu0 0.0
    %471 = vmatprep.subr.mxu0 0.0
    %472 = vmatpush1.msra.mxu0 0.0
    %473 = vmatprep.subr.mxu0 0.0
    %474 = vmatpush1.msra.mxu0 0.0
    %475 = vmatprep.subr.mxu0 0.0
    %476 = vmatpush1.msra.mxu0 0.0
    %477 = vmatprep.subr.mxu0 0.0
    %478 = vmatpush1.msra.mxu0 0.0
    %479 = vmatprep.mubr.f32.mxu0 0.0
    %480 = vmatmul.mubr.f32.gmra.mrb[0].mxu0 %v191
    %v481 = vpop.f32.mrb[0].mxu0
    %v482 = vadd.f32 0.0, %v481
    %v483 = vpop.f32.mrb[0].mxu0
    %484 = vmatprep.mubr.f32.mxu0 0.0
    %485 = vmatmul.mubr.f32.gmra.mrb[0].mxu0 %v194
    %v486 = vpop.f32.mrb[0].mxu0
    %v487 = vadd.f32 0.0, %v486
    %v488 = vpop.f32.mrb[0].mxu0
    %489 = vmatprep.mubr.f32.mxu0 0.0
    %490 = vmatmul.mubr.f32.gmra.mrb[0].mxu0 %v197
    %v491 = vpop.f32.mrb[0].mxu0
    %v492 = vadd.f32 0.0, %v491
    %v493 = vpop.f32.mrb[0].mxu0
    %494 = vmatprep.mubr.f32.mxu0 0.0
    %495 = vmatmul.mubr.f32.gmra.mrb[0].mxu0 %v200
    %v496 = vpop.f32.mrb[0].mxu0
    %v497 = vadd.f32 0.0, %v496
    %v498 = vpop.f32.mrb[0].mxu0
    %499 = vmatprep.mubr.f32.mxu0 0.0
    %500 = vmatmul.mubr.f32.gmra.mrb[0].mxu0 %v203
    %v501 = vpop.f32.mrb[0].mxu0
    %v502 = vadd.f32 0.0, %v501
    %v503 = vpop.f32.mrb[0].mxu0
    %504 = vmatprep.mubr.f32.mxu0 0.0
    %505 = vmatmul.mubr.f32.gmra.mrb[0].mxu0 %v206
    %v506 = vpop.f32.mrb[0].mxu0
    %v507 = vadd.f32 0.0, %v506
    %v508 = vpop.f32.mrb[0].mxu0
    %509 = vmatprep.mubr.f32.mxu0 0.0
    %510 = vmatmul.mubr.f32.gmra.mrb[0].mxu0 %v209
    %v511 = vpop.f32.mrb[0].mxu0
    %v512 = vadd.f32 0.0, %v511
    %v513 = vpop.f32.mrb[0].mxu0
    %514 = vmatprep.mubr.f32.mxu0 0.0
    %515 = vmatmul.mubr.f32.gmra.mrb[0].mxu0 %v212
    %v516 = vpop.f32.mrb[0].mxu0
    %v517 = vadd.f32 0.0, %v516
    %v518 = vpop.f32.mrb[0].mxu0
    %519 = vmatprep.mubr.f32.mxu0 0.0
    %520 = vmatmul.mubr.f32.gmra.mrb[0].mxu0 %v215
    %v521 = vpop.f32.mrb[0].mxu0
    %v522 = vadd.f32 0.0, %v521
    %v523 = vpop.f32.mrb[0].mxu0
    %524 = vmatprep.mubr.f32.mxu0 0.0
    %525 = vmatmul.mubr.f32.gmra.mrb[0].mxu0 %v218
    %v526 = vpop.f32.mrb[0].mxu0
    %v527 = vadd.f32 0.0, %v526
    %v528 = vpop.f32.mrb[0].mxu0
    %529 = vmatprep.mubr.f32.mxu0 0.0
    %530 = vmatmul.mubr.f32.gmra.mrb[0].mxu0 %v221
    %v531 = vpop.f32.mrb[0].mxu0
    %v532 = vadd.f32 0.0, %v531
    %v533 = vpop.f32.mrb[0].mxu0
    %534 = vmatprep.mubr.f32.mxu0 0.0
    %535 = vmatmul.mubr.f32.gmra.mrb[0].mxu0 %v224
    %v536 = vpop.f32.mrb[0].mxu0
    %v537 = vadd.f32 0.0, %v536
    %v538 = vpop.f32.mrb[0].mxu0
    %539 = vmatprep.mubr.f32.mxu0 0.0
    %540 = vmatmul.mubr.f32.gmra.mrb[0].mxu0 %v227
    %v541 = vpop.f32.mrb[0].mxu0
    %v542 = vadd.f32 0.0, %v541
    %v543 = vpop.f32.mrb[0].mxu0
    %544 = vmatprep.mubr.f32.mxu0 0.0
    %545 = vmatmul.mubr.f32.gmra.mrb[0].mxu0 %v230
    %v546 = vpop.f32.mrb[0].mxu0
    %v547 = vadd.f32 0.0, %v546
    %v548 = vpop.f32.mrb[0].mxu0
    %549 = vmatprep.mubr.f32.mxu0 0.0
    %550 = vmatmul.mubr.f32.gmra.mrb[0].mxu0 %v233
    %v551 = vpop.f32.mrb[0].mxu0
    %v552 = vadd.f32 0.0, %v551
    %v553 = vpop.f32.mrb[0].mxu0
    %554 = vmatprep.mubr.f32.mxu0 0.0
    %555 = vmatmul.mubr.f32.gmra.mrb[0].mxu0 %v236
    %v556 = vpop.f32.mrb[0].mxu0
    %v557 = vadd.f32 0.0, %v556
    %v558 = vpop.f32.mrb[0].mxu0
    %559 = vmatprep.mubr.f32.mxu0 0.0
    %560 = vmatmul.mubr.f32.gmra.mrb[0].mxu0 %v239
    %v561 = vpop.f32.mrb[0].mxu0
    %v562 = vadd.f32 0.0, %v561
    %v563 = vpop.f32.mrb[0].mxu0
    %564 = vmatprep.mubr.f32.mxu0 0.0
    %565 = vmatmul.mubr.f32.gmra.mrb[0].mxu0 %v242
    %v566 = vpop.f32.mrb[0].mxu0
    %v567 = vadd.f32 0.0, %v566
    %v568 = vpop.f32.mrb[0].mxu0
    %569 = vmatprep.mubr.f32.mxu0 0.0
    %570 = vmatmul.mubr.f32.gmra.mrb[0].mxu0 %v245
    %v571 = vpop.f32.mrb[0].mxu0
    %v572 = vadd.f32 0.0, %v571
    %v573 = vpop.f32.mrb[0].mxu0
    %574 = vmatprep.mubr.f32.mxu0 0.0
    %575 = vmatmul.mubr.f32.gmra.mrb[0].mxu0 %v248
    %v576 = vpop.f32.mrb[0].mxu0
    %v577 = vadd.f32 0.0, %v576
    %v578 = vpop.f32.mrb[0].mxu0
    %579 = vmatprep.mubr.f32.mxu0 0.0
    %580 = vmatmul.mubr.f32.gmra.mrb[0].mxu0 %v251
    %v581 = vpop.f32.mrb[0].mxu0
    %v582 = vadd.f32 0.0, %v581
    %v583 = vpop.f32.mrb[0].mxu0
    %584 = vmatprep.mubr.f32.mxu0 0.0
    %585 = vmatmul.mubr.f32.gmra.mrb[0].mxu0 %v254
    %v586 = vpop.f32.mrb[0].mxu0
    %v587 = vadd.f32 0.0, %v586
    %v588 = vpop.f32.mrb[0].mxu0
    %589 = vmatprep.mubr.f32.mxu0 0.0
    %590 = vmatmul.mubr.f32.gmra.mrb[0].mxu0 %v257
    %v591 = vpop.f32.mrb[0].mxu0
    %v592 = vadd.f32 0.0, %v591
    %v593 = vpop.f32.mrb[0].mxu0
    %594 = vmatprep.mubr.f32.mxu0 0.0
    %595 = vmatmul.mubr.f32.gmra.mrb[0].mxu0 %v260
    %v596 = vpop.f32.mrb[0].mxu0
    %v597 = vadd.f32 0.0, %v596
    %v598 = vpop.f32.mrb[0].mxu0
    %599 = vmatprep.mubr.f32.mxu0 0.0
    %600 = vmatmul.mubr.f32.gmra.mrb[0].mxu0 %v263
    %v601 = vpop.f32.mrb[0].mxu0
    %v602 = vadd.f32 0.0, %v601
    %v603 = vpop.f32.mrb[0].mxu0
    %604 = vmatprep.mubr.f32.mxu0 0.0
    %605 = vmatmul.mubr.f32.gmra.mrb[0].mxu0 %v266
    %v606 = vpop.f32.mrb[0].mxu0
    %v607 = vadd.f32 0.0, %v606
    %v608 = vpop.f32.mrb[0].mxu0
    %609 = vmatprep.mubr.f32.mxu0 0.0
    %610 = vmatmul.mubr.f32.gmra.mrb[0].mxu0 %v269
    %v611 = vpop.f32.mrb[0].mxu0
    %v612 = vadd.f32 0.0, %v611
    %v613 = vpop.f32.mrb[0].mxu0
    %614 = vmatprep.mubr.f32.mxu0 0.0
    %615 = vmatmul.mubr.f32.gmra.mrb[0].mxu0 %v272
    %v616 = vpop.f32.mrb[0].mxu0
    %v617 = vadd.f32 0.0, %v616
    %v618 = vpop.f32.mrb[0].mxu0
    %619 = vmatprep.mubr.f32.mxu0 0.0
    %620 = vmatmul.mubr.f32.gmra.mrb[0].mxu0 %v275
    %v621 = vpop.f32.mrb[0].mxu0
    %v622 = vadd.f32 0.0, %v621
    %v623 = vpop.f32.mrb[0].mxu0
    %624 = vmatprep.mubr.f32.mxu0 0.0
    %625 = vmatmul.mubr.f32.gmra.mrb[0].mxu0 %v278
    %v626 = vpop.f32.mrb[0].mxu0
    %v627 = vadd.f32 0.0, %v626
    %v628 = vpop.f32.mrb[0].mxu0
    %629 = vmatprep.mubr.f32.mxu0 0.0
    %630 = vmatmul.mubr.f32.gmra.mrb[0].mxu0 %v281
    %v631 = vpop.f32.mrb[0].mxu0
    %v632 = vadd.f32 0.0, %v631
    %v633 = vpop.f32.mrb[0].mxu0
    %634 = vmatprep.mubr.f32.mxu0 0.0
    %635 = vmatmul.mubr.f32.gmra.mrb[0].mxu0 %v284
    %v636 = vpop.f32.mrb[0].mxu0
    %v637 = vadd.f32 0.0, %v636
    %v638 = vpop.f32.mrb[0].mxu0
    %639 = vmatprep.mubr.f32.mxu0 0.0
    %640 = vmatmul.mubr.f32.gmra.mrb[0].mxu0 %v287
    %v641 = vpop.f32.mrb[0].mxu0
    %v642 = vadd.f32 0.0, %v641
    %v643 = vpop.f32.mrb[0].mxu0
    %644 = vmatprep.mubr.f32.mxu0 0.0
    %645 = vmatmul.mubr.f32.gmra.mrb[0].mxu0 %v290
    %v646 = vpop.f32.mrb[0].mxu0
    %v647 = vadd.f32 0.0, %v646
    %v648 = vpop.f32.mrb[0].mxu0
    %649 = vmatprep.mubr.f32.mxu0 0.0
    %650 = vmatmul.mubr.f32.gmra.mrb[0].mxu0 %v293
    %v651 = vpop.f32.mrb[0].mxu0
    %v652 = vadd.f32 0.0, %v651
    %v653 = vpop.f32.mrb[0].mxu0
    %654 = vmatprep.mubr.f32.mxu0 0.0
    %655 = vmatmul.mubr.f32.gmra.mrb[0].mxu0 %v296
    %v656 = vpop.f32.mrb[0].mxu0
    %v657 = vadd.f32 0.0, %v656
    %v658 = vpop.f32.mrb[0].mxu0
    %659 = vmatprep.mubr.f32.mxu0 0.0
    %660 = vmatmul.mubr.f32.gmra.mrb[0].mxu0 %v299
    %v661 = vpop.f32.mrb[0].mxu0
    %v662 = vadd.f32 0.0, %v661
    %v663 = vpop.f32.mrb[0].mxu0
    %664 = vmatprep.mubr.f32.mxu0 0.0
    %665 = vmatmul.mubr.f32.gmra.mrb[0].mxu0 %v302
    %v666 = vpop.f32.mrb[0].mxu0
    %v667 = vadd.f32 0.0, %v666
    %v668 = vpop.f32.mrb[0].mxu0
    %669 = vmatprep.mubr.f32.mxu0 0.0
    %670 = vmatmul.mubr.f32.gmra.mrb[0].mxu0 %v305
    %v671 = vpop.f32.mrb[0].mxu0
    %v672 = vadd.f32 0.0, %v671
    %v673 = vpop.f32.mrb[0].mxu0
    %674 = vmatprep.mubr.f32.mxu0 0.0
    %675 = vmatmul.mubr.f32.gmra.mrb[0].mxu0 %v308
    %v676 = vpop.f32.mrb[0].mxu0
    %v677 = vadd.f32 0.0, %v676
    %v678 = vpop.f32.mrb[0].mxu0
    %679 = vmatprep.mubr.f32.mxu0 0.0
    %680 = vmatmul.mubr.f32.gmra.mrb[0].mxu0 %v311
    %v681 = vpop.f32.mrb[0].mxu0
    %v682 = vadd.f32 0.0, %v681
    %v683 = vpop.f32.mrb[0].mxu0
    %684 = vmatprep.mubr.f32.mxu0 0.0
    %685 = vmatmul.mubr.f32.gmra.mrb[0].mxu0 %v314
    %v686 = vpop.f32.mrb[0].mxu0
    %v687 = vadd.f32 0.0, %v686
    %v688 = vpop.f32.mrb[0].mxu0
    %689 = vmatprep.mubr.f32.mxu0 0.0
    %690 = vmatmul.mubr.f32.gmra.mrb[0].mxu0 %v317
    %v691 = vpop.f32.mrb[0].mxu0
    %v692 = vadd.f32 0.0, %v691
    %v693 = vpop.f32.mrb[0].mxu0
    %694 = vmatprep.mubr.f32.mxu0 0.0
    %695 = vmatmul.mubr.f32.gmra.mrb[0].mxu0 %v320
    %v696 = vpop.f32.mrb[0].mxu0
    %v697 = vadd.f32 0.0, %v696
    %v698 = vpop.f32.mrb[0].mxu0
    %699 = vmatprep.mubr.f32.mxu0 0.0
    %700 = vmatmul.mubr.f32.gmra.mrb[0].mxu0 %v323
    %v701 = vpop.f32.mrb[0].mxu0
    %v702 = vadd.f32 0.0, %v701
    %v703 = vpop.f32.mrb[0].mxu0
    %704 = vmatprep.mubr.f32.mxu0 0.0
    %705 = vmatmul.mubr.f32.gmra.mrb[0].mxu0 %v326
    %v706 = vpop.f32.mrb[0].mxu0
    %v707 = vadd.f32 0.0, %v706
    %v708 = vpop.f32.mrb[0].mxu0
    %709 = vmatprep.mubr.f32.mxu0 0.0
    %710 = vmatmul.mubr.f32.gmra.mrb[0].mxu0 %v329
    %v711 = vpop.f32.mrb[0].mxu0
    %v712 = vadd.f32 0.0, %v711
    %v713 = vpop.f32.mrb[0].mxu0
    %714 = vmatprep.mubr.f32.mxu0 0.0
    %715 = vmatmul.mubr.f32.gmra.mrb[0].mxu0 %v332
    %v716 = vpop.f32.mrb[0].mxu0
    %v717 = vadd.f32 0.0, %v716
    %v718 = vpop.f32.mrb[0].mxu0
    %719 = vmatprep.mubr.f32.mxu0 0.0
    %720 = vmatmul.mubr.f32.gmra.mrb[0].mxu0 %v335
    %v721 = vpop.f32.mrb[0].mxu0
    %v722 = vadd.f32 0.0, %v721
    %v723 = vpop.f32.mrb[0].mxu0
    %724 = vmatprep.mubr.f32.mxu0 0.0
    %725 = vmatmul.mubr.f32.gmra.mrb[0].mxu0 %v338
    %v726 = vpop.f32.mrb[0].mxu0
    %v727 = vadd.f32 0.0, %v726
    %v728 = vpop.f32.mrb[0].mxu0
    %729 = vmatprep.mubr.f32.mxu0 0.0
    %730 = vmatmul.mubr.f32.gmra.mrb[0].mxu0 %v341
    %v731 = vpop.f32.mrb[0].mxu0
    %v732 = vadd.f32 0.0, %v731
    %v733 = vpop.f32.mrb[0].mxu0
    %734 = vmatprep.mubr.f32.mxu0 0.0
    %735 = vmatmul.mubr.f32.gmra.mrb[0].mxu0 %v344
    %v736 = vpop.f32.mrb[0].mxu0
    %v737 = vadd.f32 0.0, %v736
    %v738 = vpop.f32.mrb[0].mxu0
    %739 = vmatprep.mubr.f32.mxu0 0.0
    %740 = vmatmul.mubr.f32.gmra.mrb[0].mxu0 %v347
    %v741 = vpop.f32.mrb[0].mxu0
    %v742 = vadd.f32 0.0, %v741
    %v743 = vpop.f32.mrb[0].mxu0
    %744 = vmatprep.mubr.f32.mxu0 0.0
    %745 = vmatmul.mubr.f32.gmra.mrb[0].mxu0 %v350
    %v746 = vpop.f32.mrb[0].mxu0
    %v747 = vadd.f32 0.0, %v746
    %v748 = vpop.f32.mrb[0].mxu0
    %749 = vmatprep.mubr.f32.mxu0 0.0
    %750 = vmatmul.mubr.f32.gmra.mrb[0].mxu0 %v353
    %v751 = vpop.f32.mrb[0].mxu0
    %v752 = vadd.f32 0.0, %v751
    %v753 = vpop.f32.mrb[0].mxu0
    %754 = vmatprep.mubr.f32.mxu0 0.0
    %755 = vmatmul.mubr.f32.gmra.mrb[0].mxu0 %v356
    %v756 = vpop.f32.mrb[0].mxu0
    %v757 = vadd.f32 0.0, %v756
    %v758 = vpop.f32.mrb[0].mxu0
    %759 = vmatprep.mubr.f32.mxu0 0.0
    %760 = vmatmul.mubr.f32.gmra.mrb[0].mxu0 %v359
    %v761 = vpop.f32.mrb[0].mxu0
    %v762 = vadd.f32 0.0, %v761
    %v763 = vpop.f32.mrb[0].mxu0
    %764 = vmatprep.mubr.f32.mxu0 0.0
    %765 = vmatmul.mubr.f32.gmra.mrb[0].mxu0 %v362
    %v766 = vpop.f32.mrb[0].mxu0
    %v767 = vadd.f32 0.0, %v766
    %v768 = vpop.f32.mrb[0].mxu0
    %769 = vmatprep.mubr.f32.mxu0 0.0
    %770 = vmatmul.mubr.f32.gmra.mrb[0].mxu0 %v365
    %v771 = vpop.f32.mrb[0].mxu0
    %v772 = vadd.f32 0.0, %v771
    %v773 = vpop.f32.mrb[0].mxu0
    %774 = vmatprep.mubr.f32.mxu0 0.0
    %775 = vmatmul.mubr.f32.gmra.mrb[0].mxu0 %v368
    %v776 = vpop.f32.mrb[0].mxu0
    %v777 = vadd.f32 0.0, %v776
    %v778 = vpop.f32.mrb[0].mxu0
    %779 = vmatprep.mubr.f32.mxu0 0.0
    %780 = vmatmul.mubr.f32.gmra.mrb[0].mxu0 %v371
    %v781 = vpop.f32.mrb[0].mxu0
    %v782 = vadd.f32 0.0, %v781
    %v783 = vpop.f32.mrb[0].mxu0
    %784 = vmatprep.mubr.f32.mxu0 0.0
    %785 = vmatmul.mubr.f32.gmra.mrb[0].mxu0 %v374
    %v786 = vpop.f32.mrb[0].mxu0
    %v787 = vadd.f32 0.0, %v786
    %v788 = vpop.f32.mrb[0].mxu0
    %789 = vmatprep.mubr.f32.mxu0 0.0
    %790 = vmatmul.mubr.f32.gmra.mrb[0].mxu0 %v377
    %v791 = vpop.f32.mrb[0].mxu0
    %v792 = vadd.f32 0.0, %v791
    %v793 = vpop.f32.mrb[0].mxu0
    %794 = vmatprep.mubr.f32.mxu0 0.0
    %795 = vmatmul.mubr.f32.gmra.mrb[0].mxu0 %v380
    %v796 = vpop.f32.mrb[0].mxu0
    %v797 = vadd.f32 0.0, %v796
    %v798 = vpop.f32.mrb[0].mxu0
    %799 = vmatprep.mubr.f32.mxu0 0.0
    %800 = vmatmul.mubr.f32.gmra.mrb[0].mxu0 %v383
    %v801 = vpop.f32.mrb[0].mxu0
    %v802 = vadd.f32 0.0, %v801
    %v803 = vpop.f32.mrb[0].mxu0
    %804 = vmatprep.mubr.f32.mxu0 0.0
    %805 = vmatmul.mubr.f32.gmra.mrb[0].mxu0 %v386
    %v806 = vpop.f32.mrb[0].mxu0
    %v807 = vadd.f32 0.0, %v806
    %v808 = vpop.f32.mrb[0].mxu0
    %809 = vmatprep.mubr.f32.mxu0 0.0
    %810 = vmatmul.mubr.f32.gmra.mrb[0].mxu0 %v389
    %v811 = vpop.f32.mrb[0].mxu0
    %v812 = vadd.f32 0.0, %v811
    %v813 = vpop.f32.mrb[0].mxu0
    %814 = vmatprep.mubr.f32.mxu0 0.0
    %815 = vmatmul.mubr.f32.gmra.mrb[0].mxu0 %v392
    %v816 = vpop.f32.mrb[0].mxu0
    %v817 = vadd.f32 0.0, %v816
    %v818 = vpop.f32.mrb[0].mxu0
    %819 = vmatprep.mubr.f32.mxu0 0.0
    %820 = vmatmul.mubr.f32.gmra.mrb[0].mxu0 %v395
    %v821 = vpop.f32.mrb[0].mxu0
    %v822 = vadd.f32 0.0, %v821
    %v823 = vpop.f32.mrb[0].mxu0
    %824 = vmatprep.mubr.f32.mxu0 0.0
    %825 = vmatmul.mubr.f32.gmra.mrb[0].mxu0 %v398
    %v826 = vpop.f32.mrb[0].mxu0
    %v827 = vadd.f32 0.0, %v826
    %v828 = vpop.f32.mrb[0].mxu0
    %829 = vmatprep.mubr.f32.mxu0 0.0
    %830 = vmatmul.mubr.f32.gmra.mrb[0].mxu0 %v401
    %v831 = vpop.f32.mrb[0].mxu0
    %v832 = vadd.f32 0.0, %v831
    %v833 = vpop.f32.mrb[0].mxu0
    %834 = vmatprep.mubr.f32.mxu0 0.0
    %835 = vmatmul.mubr.f32.gmra.mrb[0].mxu0 %v404
    %v836 = vpop.f32.mrb[0].mxu0
    %v837 = vadd.f32 0.0, %v836
    %v838 = vpop.f32.mrb[0].mxu0
    %839 = vmatprep.mubr.f32.mxu0 0.0
    %840 = vmatmul.mubr.f32.gmra.mrb[0].mxu0 %v407
    %v841 = vpop.f32.mrb[0].mxu0
    %v842 = vadd.f32 0.0, %v841
    %v843 = vpop.f32.mrb[0].mxu0
    %844 = vmatprep.mubr.f32.mxu0 0.0
    %845 = vmatmul.mubr.f32.gmra.mrb[0].mxu0 %v410
    %v846 = vpop.f32.mrb[0].mxu0
    %v847 = vadd.f32 0.0, %v846
    %v848 = vpop.f32.mrb[0].mxu0
    %849 = vmatprep.mubr.f32.mxu0 0.0
    %850 = vmatmul.mubr.f32.gmra.mrb[0].mxu0 %v413
    %v851 = vpop.f32.mrb[0].mxu0
    %v852 = vadd.f32 0.0, %v851
    %v853 = vpop.f32.mrb[0].mxu0
    %854 = vdwg.mxu0
    %v856 = vsel %vm189, %v31, 0
    %v859 = vsel %vm189, %v32, 0
    %v862 = vsel %vm189, %v33, 0
    %v865 = vsel %vm189, %v34, 0
    %v868 = vsel %vm189, %v35, 0
    %v871 = vsel %vm189, %v36, 0
    %v874 = vsel %vm189, %v37, 0
    %v877 = vsel %vm189, %v38, 0
    %v880 = vsel %vm189, %v39, 0
    %v883 = vsel %vm189, %v40, 0
    %v886 = vsel %vm189, %v41, 0
    %v889 = vsel %vm189, %v42, 0
    %v892 = vsel %vm189, %v43, 0
    %v895 = vsel %vm189, %v44, 0
    %v898 = vsel %vm189, %v45, 0
    %v901 = vsel %vm189, %v46, 0
    %v904 = vsel %vm189, %v47, 0
    %v907 = vsel %vm189, %v48, 0
    %v910 = vsel %vm189, %v49, 0
    %v913 = vsel %vm189, %v50, 0
    %v916 = vsel %vm189, %v51, 0
    %v919 = vsel %vm189, %v52, 0
    %v922 = vsel %vm189, %v53, 0
    %v925 = vsel %vm189, %v54, 0
    %v928 = vsel %vm189, %v55, 0
    %v931 = vsel %vm189, %v56, 0
    %v934 = vsel %vm189, %v57, 0
    %v937 = vsel %vm189, %v58, 0
    %v940 = vsel %vm189, %v59, 0
    %v943 = vsel %vm189, %v60, 0
    %v946 = vsel %vm189, %v61, 0
    %v949 = vsel %vm189, %v62, 0
    %v952 = vsel %vm189, %v63, 0
    %v955 = vsel %vm189, %v64, 0
    %v958 = vsel %vm189, %v65, 0
    %v961 = vsel %vm189, %v66, 0
    %v964 = vsel %vm189, %v67, 0
    %v967 = vsel %vm189, %v68, 0
    %v970 = vsel %vm189, %v69, 0
    %v973 = vsel %vm189, %v70, 0
    %v976 = vsel %vm189, %v71, 0
    %v979 = vsel %vm189, %v72, 0
    %v982 = vsel %vm189, %v73, 0
    %v985 = vsel %vm189, %v74, 0
    %v988 = vsel %vm189, %v75, 0
    %v991 = vsel %vm189, %v76, 0
    %v994 = vsel %vm189, %v77, 0
    %v997 = vsel %vm189, %v78, 0
    %v1000 = vsel %vm189, %v79, 0
    %v1003 = vsel %vm189, %v80, 0
    %v1006 = vsel %vm189, %v81, 0
    %v1009 = vsel %vm189, %v82, 0
    %v1012 = vsel %vm189, %v83, 0
    %v1015 = vsel %vm189, %v84, 0
    %v1018 = vsel %vm189, %v85, 0
    %v1021 = vsel %vm189, %v86, 0
    %v1024 = vsel %vm189, %v87, 0
    %v1027 = vsel %vm189, %v88, 0
    %v1030 = vsel %vm189, %v89, 0
    %v1033 = vsel %vm189, %v90, 0
    %v1036 = vsel %vm189, %v91, 0
    %v1039 = vsel %vm189, %v92, 0
    %v1042 = vsel %vm189, %v93, 0
    %v1045 = vsel %vm189, %v94, 0
    %v1048 = vsel %vm189, %v95, 0
    %v1051 = vsel %vm189, %v96, 0
    %v1054 = vsel %vm189, %v97, 0
    %v1057 = vsel %vm189, %v98, 0
    %v1060 = vsel %vm189, %v99, 0
    %v1063 = vsel %vm189, %v100, 0
    %v1066 = vsel %vm189, %v101, 0
    %v1069 = vsel %vm189, %v102, 0
    %v1072 = vsel %vm189, %v103, 0
    %v1075 = vsel %vm189, %v104, 0
    %v1078 = vsel %vm189, %v105, 0
    %1080 = vmatprep.subr.mxu0 0.0
    %1081 = vmatpush1.msra.mxu0 %v106
    %1082 = vmatprep.subr.mxu0 0.0
    %1083 = vmatpush1.msra.mxu0 %v107
    %1084 = vmatprep.subr.mxu0 0.0
    %1085 = vmatpush1.msra.mxu0 %v108
    %1086 = vmatprep.subr.mxu0 0.0
    %1087 = vmatpush1.msra.mxu0 %v109
    %1088 = vmatprep.subr.mxu0 0.0
    %1089 = vmatpush1.msra.mxu0 0.0
    %1090 = vmatprep.subr.mxu0 0.0
    %1091 = vmatpush1.msra.mxu0 0.0
    %1092 = vmatprep.subr.mxu0 0.0
    %1093 = vmatpush1.msra.mxu0 0.0
    %1094 = vmatprep.subr.mxu0 0.0
    %1095 = vmatpush1.msra.mxu0 0.0
    %1096 = vmatprep.subr.mxu0 0.0
    %1097 = vmatpush1.msra.mxu0 0.0
    %1098 = vmatprep.subr.mxu0 0.0
    %1099 = vmatpush1.msra.mxu0 0.0
    %1100 = vmatprep.subr.mxu0 0.0
    %1101 = vmatpush1.msra.mxu0 0.0
    %1102 = vmatprep.subr.mxu0 0.0
    %1103 = vmatpush1.msra.mxu0 0.0
    %1104 = vmatprep.subr.mxu0 0.0
    %1105 = vmatpush1.msra.mxu0 0.0
    %1106 = vmatprep.subr.mxu0 0.0
    %1107 = vmatpush1.msra.mxu0 0.0
    %1108 = vmatprep.subr.mxu0 0.0
    %1109 = vmatpush1.msra.mxu0 0.0
    %1110 = vmatprep.subr.mxu0 0.0
    %1111 = vmatpush1.msra.mxu0 0.0
    %1112 = vmatprep.subr.mxu0 0.0
    %1113 = vmatpush1.msra.mxu0 0.0
    %1114 = vmatprep.subr.mxu0 0.0
    %1115 = vmatpush1.msra.mxu0 0.0
    %1116 = vmatprep.subr.mxu0 0.0
    %1117 = vmatpush1.msra.mxu0 0.0
    %1118 = vmatprep.subr.mxu0 0.0
    %1119 = vmatpush1.msra.mxu0 0.0
    %1120 = vmatprep.subr.mxu0 0.0
    %1121 = vmatpush1.msra.mxu0 0.0
    %1122 = vmatprep.subr.mxu0 0.0
    %1123 = vmatpush1.msra.mxu0 0.0
    %1124 = vmatprep.subr.mxu0 0.0
    %1125 = vmatpush1.msra.mxu0 0.0
    %1126 = vmatprep.subr.mxu0 0.0
    %1127 = vmatpush1.msra.mxu0 0.0
    %1128 = vmatprep.subr.mxu0 0.0
    %1129 = vmatpush1.msra.mxu0 0.0
    %1130 = vmatprep.subr.mxu0 0.0
    %1131 = vmatpush1.msra.mxu0 0.0
    %1132 = vmatprep.subr.mxu0 0.0
    %1133 = vmatpush1.msra.mxu0 0.0
    %1134 = vmatprep.subr.mxu0 0.0
    %1135 = vmatpush1.msra.mxu0 0.0
    %1136 = vmatprep.subr.mxu0 0.0
    %1137 = vmatpush1.msra.mxu0 0.0
    %1138 = vmatprep.subr.mxu0 0.0
    %1139 = vmatpush1.msra.mxu0 0.0
    %1140 = vmatprep.subr.mxu0 0.0
    %1141 = vmatpush1.msra.mxu0 0.0
    %1142 = vmatprep.subr.mxu0 0.0
    %1143 = vmatpush1.msra.mxu0 0.0
    %1144 = vmatprep.mubr.f32.mxu0 0.0
    %1145 = vmatmul.mubr.f32.gmra.mrb[0].mxu0 %v856
    %v1146 = vpop.f32.mrb[0].mxu0
    %v1147 = vadd.f32 %v482, %v1146
    %v1148 = vpop.f32.mrb[0].mxu0
    %1149 = vmatprep.mubr.f32.mxu0 0.0
    %1150 = vmatmul.mubr.f32.gmra.mrb[0].mxu0 %v859
    %v1151 = vpop.f32.mrb[0].mxu0
    %v1152 = vadd.f32 %v487, %v1151
    %v1153 = vpop.f32.mrb[0].mxu0
    %1154 = vmatprep.mubr.f32.mxu0 0.0
    %1155 = vmatmul.mubr.f32.gmra.mrb[0].mxu0 %v862
    %v1156 = vpop.f32.mrb[0].mxu0
    %v1157 = vadd.f32 %v492, %v1156
    %v1158 = vpop.f32.mrb[0].mxu0
    %1159 = vmatprep.mubr.f32.mxu0 0.0
    %1160 = vmatmul.mubr.f32.gmra.mrb[0].mxu0 %v865
    %v1161 = vpop.f32.mrb[0].mxu0
    %v1162 = vadd.f32 %v497, %v1161
    %v1163 = vpop.f32.mrb[0].mxu0
    %1164 = vmatprep.mubr.f32.mxu0 0.0
    %1165 = vmatmul.mubr.f32.gmra.mrb[0].mxu0 %v868
    %v1166 = vpop.f32.mrb[0].mxu0
    %v1167 = vadd.f32 %v502, %v1166
    %v1168 = vpop.f32.mrb[0].mxu0
    %1169 = vmatprep.mubr.f32.mxu0 0.0
    %1170 = vmatmul.mubr.f32.gmra.mrb[0].mxu0 %v871
    %v1171 = vpop.f32.mrb[0].mxu0
    %v1172 = vadd.f32 %v507, %v1171
    %v1173 = vpop.f32.mrb[0].mxu0
    %1174 = vmatprep.mubr.f32.mxu0 0.0
    %1175 = vmatmul.mubr.f32.gmra.mrb[0].mxu0 %v874
    %v1176 = vpop.f32.mrb[0].mxu0
    %v1177 = vadd.f32 %v512, %v1176
    %v1178 = vpop.f32.mrb[0].mxu0
    %1179 = vmatprep.mubr.f32.mxu0 0.0
    %1180 = vmatmul.mubr.f32.gmra.mrb[0].mxu0 %v877
    %v1181 = vpop.f32.mrb[0].mxu0
    %v1182 = vadd.f32 %v517, %v1181
    %v1183 = vpop.f32.mrb[0].mxu0
    %1184 = vmatprep.mubr.f32.mxu0 0.0
    %1185 = vmatmul.mubr.f32.gmra.mrb[0].mxu0 %v880
    %v1186 = vpop.f32.mrb[0].mxu0
    %v1187 = vadd.f32 %v522, %v1186
    %v1188 = vpop.f32.mrb[0].mxu0
    %1189 = vmatprep.mubr.f32.mxu0 0.0
    %1190 = vmatmul.mubr.f32.gmra.mrb[0].mxu0 %v883
    %v1191 = vpop.f32.mrb[0].mxu0
    %v1192 = vadd.f32 %v527, %v1191
    %v1193 = vpop.f32.mrb[0].mxu0
    %1194 = vmatprep.mubr.f32.mxu0 0.0
    %1195 = vmatmul.mubr.f32.gmra.mrb[0].mxu0 %v886
    %v1196 = vpop.f32.mrb[0].mxu0
    %v1197 = vadd.f32 %v532, %v1196
    %v1198 = vpop.f32.mrb[0].mxu0
    %1199 = vmatprep.mubr.f32.mxu0 0.0
    %1200 = vmatmul.mubr.f32.gmra.mrb[0].mxu0 %v889
    %v1201 = vpop.f32.mrb[0].mxu0
    %v1202 = vadd.f32 %v537, %v1201
    %v1203 = vpop.f32.mrb[0].mxu0
    %1204 = vmatprep.mubr.f32.mxu0 0.0
    %1205 = vmatmul.mubr.f32.gmra.mrb[0].mxu0 %v892
    %v1206 = vpop.f32.mrb[0].mxu0
    %v1207 = vadd.f32 %v542, %v1206
    %v1208 = vpop.f32.mrb[0].mxu0
    %1209 = vmatprep.mubr.f32.mxu0 0.0
    %1210 = vmatmul.mubr.f32.gmra.mrb[0].mxu0 %v895
    %v1211 = vpop.f32.mrb[0].mxu0
    %v1212 = vadd.f32 %v547, %v1211
    %v1213 = vpop.f32.mrb[0].mxu0
    %1214 = vmatprep.mubr.f32.mxu0 0.0
    %1215 = vmatmul.mubr.f32.gmra.mrb[0].mxu0 %v898
    %v1216 = vpop.f32.mrb[0].mxu0
    %v1217 = vadd.f32 %v552, %v1216
    %v1218 = vpop.f32.mrb[0].mxu0
    %1219 = vmatprep.mubr.f32.mxu0 0.0
    %1220 = vmatmul.mubr.f32.gmra.mrb[0].mxu0 %v901
    %v1221 = vpop.f32.mrb[0].mxu0
    %v1222 = vadd.f32 %v557, %v1221
    %v1223 = vpop.f32.mrb[0].mxu0
    %1224 = vmatprep.mubr.f32.mxu0 0.0
    %1225 = vmatmul.mubr.f32.gmra.mrb[0].mxu0 %v904
    %v1226 = vpop.f32.mrb[0].mxu0
    %v1227 = vadd.f32 %v562, %v1226
    %v1228 = vpop.f32.mrb[0].mxu0
    %1229 = vmatprep.mubr.f32.mxu0 0.0
    %1230 = vmatmul.mubr.f32.gmra.mrb[0].mxu0 %v907
    %v1231 = vpop.f32.mrb[0].mxu0
    %v1232 = vadd.f32 %v567, %v1231
    %v1233 = vpop.f32.mrb[0].mxu0
    %1234 = vmatprep.mubr.f32.mxu0 0.0
    %1235 = vmatmul.mubr.f32.gmra.mrb[0].mxu0 %v910
    %v1236 = vpop.f32.mrb[0].mxu0
    %v1237 = vadd.f32 %v572, %v1236
    %v1238 = vpop.f32.mrb[0].mxu0
    %1239 = vmatprep.mubr.f32.mxu0 0.0
    %1240 = vmatmul.mubr.f32.gmra.mrb[0].mxu0 %v913
    %v1241 = vpop.f32.mrb[0].mxu0
    %v1242 = vadd.f32 %v577, %v1241
    %v1243 = vpop.f32.mrb[0].mxu0
    %1244 = vmatprep.mubr.f32.mxu0 0.0
    %1245 = vmatmul.mubr.f32.gmra.mrb[0].mxu0 %v916
    %v1246 = vpop.f32.mrb[0].mxu0
    %v1247 = vadd.f32 %v582, %v1246
    %v1248 = vpop.f32.mrb[0].mxu0
    %1249 = vmatprep.mubr.f32.mxu0 0.0
    %1250 = vmatmul.mubr.f32.gmra.mrb[0].mxu0 %v919
    %v1251 = vpop.f32.mrb[0].mxu0
    %v1252 = vadd.f32 %v587, %v1251
    %v1253 = vpop.f32.mrb[0].mxu0
    %1254 = vmatprep.mubr.f32.mxu0 0.0
    %1255 = vmatmul.mubr.f32.gmra.mrb[0].mxu0 %v922
    %v1256 = vpop.f32.mrb[0].mxu0
    %v1257 = vadd.f32 %v592, %v1256
    %v1258 = vpop.f32.mrb[0].mxu0
    %1259 = vmatprep.mubr.f32.mxu0 0.0
    %1260 = vmatmul.mubr.f32.gmra.mrb[0].mxu0 %v925
    %v1261 = vpop.f32.mrb[0].mxu0
    %v1262 = vadd.f32 %v597, %v1261
    %v1263 = vpop.f32.mrb[0].mxu0
    %1264 = vmatprep.mubr.f32.mxu0 0.0
    %1265 = vmatmul.mubr.f32.gmra.mrb[0].mxu0 %v928
    %v1266 = vpop.f32.mrb[0].mxu0
    %v1267 = vadd.f32 %v602, %v1266
    %v1268 = vpop.f32.mrb[0].mxu0
    %1269 = vmatprep.mubr.f32.mxu0 0.0
    %1270 = vmatmul.mubr.f32.gmra.mrb[0].mxu0 %v931
    %v1271 = vpop.f32.mrb[0].mxu0
    %v1272 = vadd.f32 %v607, %v1271
    %v1273 = vpop.f32.mrb[0].mxu0
    %1274 = vmatprep.mubr.f32.mxu0 0.0
    %1275 = vmatmul.mubr.f32.gmra.mrb[0].mxu0 %v934
    %v1276 = vpop.f32.mrb[0].mxu0
    %v1277 = vadd.f32 %v612, %v1276
    %v1278 = vpop.f32.mrb[0].mxu0
    %1279 = vmatprep.mubr.f32.mxu0 0.0
    %1280 = vmatmul.mubr.f32.gmra.mrb[0].mxu0 %v937
    %v1281 = vpop.f32.mrb[0].mxu0
    %v1282 = vadd.f32 %v617, %v1281
    %v1283 = vpop.f32.mrb[0].mxu0
    %1284 = vmatprep.mubr.f32.mxu0 0.0
    %1285 = vmatmul.mubr.f32.gmra.mrb[0].mxu0 %v940
    %v1286 = vpop.f32.mrb[0].mxu0
    %v1287 = vadd.f32 %v622, %v1286
    %v1288 = vpop.f32.mrb[0].mxu0
    %1289 = vmatprep.mubr.f32.mxu0 0.0
    %1290 = vmatmul.mubr.f32.gmra.mrb[0].mxu0 %v943
    %v1291 = vpop.f32.mrb[0].mxu0
    %v1292 = vadd.f32 %v627, %v1291
    %v1293 = vpop.f32.mrb[0].mxu0
    %1294 = vmatprep.mubr.f32.mxu0 0.0
    %1295 = vmatmul.mubr.f32.gmra.mrb[0].mxu0 %v946
    %v1296 = vpop.f32.mrb[0].mxu0
    %v1297 = vadd.f32 %v632, %v1296
    %v1298 = vpop.f32.mrb[0].mxu0
    %1299 = vmatprep.mubr.f32.mxu0 0.0
    %1300 = vmatmul.mubr.f32.gmra.mrb[0].mxu0 %v949
    %v1301 = vpop.f32.mrb[0].mxu0
    %v1302 = vadd.f32 %v637, %v1301
    %v1303 = vpop.f32.mrb[0].mxu0
    %1304 = vmatprep.mubr.f32.mxu0 0.0
    %1305 = vmatmul.mubr.f32.gmra.mrb[0].mxu0 %v952
    %v1306 = vpop.f32.mrb[0].mxu0
    %v1307 = vadd.f32 %v642, %v1306
    %v1308 = vpop.f32.mrb[0].mxu0
    %1309 = vmatprep.mubr.f32.mxu0 0.0
    %1310 = vmatmul.mubr.f32.gmra.mrb[0].mxu0 %v955
    %v1311 = vpop.f32.mrb[0].mxu0
    %v1312 = vadd.f32 %v647, %v1311
    %v1313 = vpop.f32.mrb[0].mxu0
    %1314 = vmatprep.mubr.f32.mxu0 0.0
    %1315 = vmatmul.mubr.f32.gmra.mrb[0].mxu0 %v958
    %v1316 = vpop.f32.mrb[0].mxu0
    %v1317 = vadd.f32 %v652, %v1316
    %v1318 = vpop.f32.mrb[0].mxu0
    %1319 = vmatprep.mubr.f32.mxu0 0.0
    %1320 = vmatmul.mubr.f32.gmra.mrb[0].mxu0 %v961
    %v1321 = vpop.f32.mrb[0].mxu0
    %v1322 = vadd.f32 %v657, %v1321
    %v1323 = vpop.f32.mrb[0].mxu0
    %1324 = vmatprep.mubr.f32.mxu0 0.0
    %1325 = vmatmul.mubr.f32.gmra.mrb[0].mxu0 %v964
    %v1326 = vpop.f32.mrb[0].mxu0
    %v1327 = vadd.f32 %v662, %v1326
    %v1328 = vpop.f32.mrb[0].mxu0
    %1329 = vmatprep.mubr.f32.mxu0 0.0
    %1330 = vmatmul.mubr.f32.gmra.mrb[0].mxu0 %v967
    %v1331 = vpop.f32.mrb[0].mxu0
    %v1332 = vadd.f32 %v667, %v1331
    %v1333 = vpop.f32.mrb[0].mxu0
    %1334 = vmatprep.mubr.f32.mxu0 0.0
    %1335 = vmatmul.mubr.f32.gmra.mrb[0].mxu0 %v970
    %v1336 = vpop.f32.mrb[0].mxu0
    %v1337 = vadd.f32 %v672, %v1336
    %v1338 = vpop.f32.mrb[0].mxu0
    %1339 = vmatprep.mubr.f32.mxu0 0.0
    %1340 = vmatmul.mubr.f32.gmra.mrb[0].mxu0 %v973
    %v1341 = vpop.f32.mrb[0].mxu0
    %v1342 = vadd.f32 %v677, %v1341
    %v1343 = vpop.f32.mrb[0].mxu0
    %1344 = vmatprep.mubr.f32.mxu0 0.0
    %1345 = vmatmul.mubr.f32.gmra.mrb[0].mxu0 %v976
    %v1346 = vpop.f32.mrb[0].mxu0
    %v1347 = vadd.f32 %v682, %v1346
    %v1348 = vpop.f32.mrb[0].mxu0
    %1349 = vmatprep.mubr.f32.mxu0 0.0
    %1350 = vmatmul.mubr.f32.gmra.mrb[0].mxu0 %v979
    %v1351 = vpop.f32.mrb[0].mxu0
    %v1352 = vadd.f32 %v687, %v1351
    %v1353 = vpop.f32.mrb[0].mxu0
    %1354 = vmatprep.mubr.f32.mxu0 0.0
    %1355 = vmatmul.mubr.f32.gmra.mrb[0].mxu0 %v982
    %v1356 = vpop.f32.mrb[0].mxu0
    %v1357 = vadd.f32 %v692, %v1356
    %v1358 = vpop.f32.mrb[0].mxu0
    %1359 = vmatprep.mubr.f32.mxu0 0.0
    %1360 = vmatmul.mubr.f32.gmra.mrb[0].mxu0 %v985
    %v1361 = vpop.f32.mrb[0].mxu0
    %v1362 = vadd.f32 %v697, %v1361
    %v1363 = vpop.f32.mrb[0].mxu0
    %1364 = vmatprep.mubr.f32.mxu0 0.0
    %1365 = vmatmul.mubr.f32.gmra.mrb[0].mxu0 %v988
    %v1366 = vpop.f32.mrb[0].mxu0
    %v1367 = vadd.f32 %v702, %v1366
    %v1368 = vpop.f32.mrb[0].mxu0
    %1369 = vmatprep.mubr.f32.mxu0 0.0
    %1370 = vmatmul.mubr.f32.gmra.mrb[0].mxu0 %v991
    %v1371 = vpop.f32.mrb[0].mxu0
    %v1372 = vadd.f32 %v707, %v1371
    %v1373 = vpop.f32.mrb[0].mxu0
    %1374 = vmatprep.mubr.f32.mxu0 0.0
    %1375 = vmatmul.mubr.f32.gmra.mrb[0].mxu0 %v994
    %v1376 = vpop.f32.mrb[0].mxu0
    %v1377 = vadd.f32 %v712, %v1376
    %v1378 = vpop.f32.mrb[0].mxu0
    %1379 = vmatprep.mubr.f32.mxu0 0.0
    %1380 = vmatmul.mubr.f32.gmra.mrb[0].mxu0 %v997
    %v1381 = vpop.f32.mrb[0].mxu0
    %v1382 = vadd.f32 %v717, %v1381
    %v1383 = vpop.f32.mrb[0].mxu0
    %1384 = vmatprep.mubr.f32.mxu0 0.0
    %1385 = vmatmul.mubr.f32.gmra.mrb[0].mxu0 %v1000
    %v1386 = vpop.f32.mrb[0].mxu0
    %v1387 = vadd.f32 %v722, %v1386
    %v1388 = vpop.f32.mrb[0].mxu0
    %1389 = vmatprep.mubr.f32.mxu0 0.0
    %1390 = vmatmul.mubr.f32.gmra.mrb[0].mxu0 %v1003
    %v1391 = vpop.f32.mrb[0].mxu0
    %v1392 = vadd.f32 %v727, %v1391
    %v1393 = vpop.f32.mrb[0].mxu0
    %1394 = vmatprep.mubr.f32.mxu0 0.0
    %1395 = vmatmul.mubr.f32.gmra.mrb[0].mxu0 %v1006
    %v1396 = vpop.f32.mrb[0].mxu0
    %v1397 = vadd.f32 %v732, %v1396
    %v1398 = vpop.f32.mrb[0].mxu0
    %1399 = vmatprep.mubr.f32.mxu0 0.0
    %1400 = vmatmul.mubr.f32.gmra.mrb[0].mxu0 %v1009
    %v1401 = vpop.f32.mrb[0].mxu0
    %v1402 = vadd.f32 %v737, %v1401
    %v1403 = vpop.f32.mrb[0].mxu0
    %1404 = vmatprep.mubr.f32.mxu0 0.0
    %1405 = vmatmul.mubr.f32.gmra.mrb[0].mxu0 %v1012
    %v1406 = vpop.f32.mrb[0].mxu0
    %v1407 = vadd.f32 %v742, %v1406
    %v1408 = vpop.f32.mrb[0].mxu0
    %1409 = vmatprep.mubr.f32.mxu0 0.0
    %1410 = vmatmul.mubr.f32.gmra.mrb[0].mxu0 %v1015
    %v1411 = vpop.f32.mrb[0].mxu0
    %v1412 = vadd.f32 %v747, %v1411
    %v1413 = vpop.f32.mrb[0].mxu0
    %1414 = vmatprep.mubr.f32.mxu0 0.0
    %1415 = vmatmul.mubr.f32.gmra.mrb[0].mxu0 %v1018
    %v1416 = vpop.f32.mrb[0].mxu0
    %v1417 = vadd.f32 %v752, %v1416
    %v1418 = vpop.f32.mrb[0].mxu0
    %1419 = vmatprep.mubr.f32.mxu0 0.0
    %1420 = vmatmul.mubr.f32.gmra.mrb[0].mxu0 %v1021
    %v1421 = vpop.f32.mrb[0].mxu0
    %v1422 = vadd.f32 %v757, %v1421
    %v1423 = vpop.f32.mrb[0].mxu0
    %1424 = vmatprep.mubr.f32.mxu0 0.0
    %1425 = vmatmul.mubr.f32.gmra.mrb[0].mxu0 %v1024
    %v1426 = vpop.f32.mrb[0].mxu0
    %v1427 = vadd.f32 %v762, %v1426
    %v1428 = vpop.f32.mrb[0].mxu0
    %1429 = vmatprep.mubr.f32.mxu0 0.0
    %1430 = vmatmul.mubr.f32.gmra.mrb[0].mxu0 %v1027
    %v1431 = vpop.f32.mrb[0].mxu0
    %v1432 = vadd.f32 %v767, %v1431
    %v1433 = vpop.f32.mrb[0].mxu0
    %1434 = vmatprep.mubr.f32.mxu0 0.0
    %1435 = vmatmul.mubr.f32.gmra.mrb[0].mxu0 %v1030
    %v1436 = vpop.f32.mrb[0].mxu0
    %v1437 = vadd.f32 %v772, %v1436
    %v1438 = vpop.f32.mrb[0].mxu0
    %1439 = vmatprep.mubr.f32.mxu0 0.0
    %1440 = vmatmul.mubr.f32.gmra.mrb[0].mxu0 %v1033
    %v1441 = vpop.f32.mrb[0].mxu0
    %v1442 = vadd.f32 %v777, %v1441
    %v1443 = vpop.f32.mrb[0].mxu0
    %1444 = vmatprep.mubr.f32.mxu0 0.0
    %1445 = vmatmul.mubr.f32.gmra.mrb[0].mxu0 %v1036
    %v1446 = vpop.f32.mrb[0].mxu0
    %v1447 = vadd.f32 %v782, %v1446
    %v1448 = vpop.f32.mrb[0].mxu0
    %1449 = vmatprep.mubr.f32.mxu0 0.0
    %1450 = vmatmul.mubr.f32.gmra.mrb[0].mxu0 %v1039
    %v1451 = vpop.f32.mrb[0].mxu0
    %v1452 = vadd.f32 %v787, %v1451
    %v1453 = vpop.f32.mrb[0].mxu0
    %1454 = vmatprep.mubr.f32.mxu0 0.0
    %1455 = vmatmul.mubr.f32.gmra.mrb[0].mxu0 %v1042
    %v1456 = vpop.f32.mrb[0].mxu0
    %v1457 = vadd.f32 %v792, %v1456
    %v1458 = vpop.f32.mrb[0].mxu0
    %1459 = vmatprep.mubr.f32.mxu0 0.0
    %1460 = vmatmul.mubr.f32.gmra.mrb[0].mxu0 %v1045
    %v1461 = vpop.f32.mrb[0].mxu0
    %v1462 = vadd.f32 %v797, %v1461
    %v1463 = vpop.f32.mrb[0].mxu0
    %1464 = vmatprep.mubr.f32.mxu0 0.0
    %1465 = vmatmul.mubr.f32.gmra.mrb[0].mxu0 %v1048
    %v1466 = vpop.f32.mrb[0].mxu0
    %v1467 = vadd.f32 %v802, %v1466
    %v1468 = vpop.f32.mrb[0].mxu0
    %1469 = vmatprep.mubr.f32.mxu0 0.0
    %1470 = vmatmul.mubr.f32.gmra.mrb[0].mxu0 %v1051
    %v1471 = vpop.f32.mrb[0].mxu0
    %v1472 = vadd.f32 %v807, %v1471
    %v1473 = vpop.f32.mrb[0].mxu0
    %1474 = vmatprep.mubr.f32.mxu0 0.0
    %1475 = vmatmul.mubr.f32.gmra.mrb[0].mxu0 %v1054
    %v1476 = vpop.f32.mrb[0].mxu0
    %v1477 = vadd.f32 %v812, %v1476
    %v1478 = vpop.f32.mrb[0].mxu0
    %1479 = vmatprep.mubr.f32.mxu0 0.0
    %1480 = vmatmul.mubr.f32.gmra.mrb[0].mxu0 %v1057
    %v1481 = vpop.f32.mrb[0].mxu0
    %v1482 = vadd.f32 %v817, %v1481
    %v1483 = vpop.f32.mrb[0].mxu0
    %1484 = vmatprep.mubr.f32.mxu0 0.0
    %1485 = vmatmul.mubr.f32.gmra.mrb[0].mxu0 %v1060
    %v1486 = vpop.f32.mrb[0].mxu0
    %v1487 = vadd.f32 %v822, %v1486
    %v1488 = vpop.f32.mrb[0].mxu0
    %1489 = vmatprep.mubr.f32.mxu0 0.0
    %1490 = vmatmul.mubr.f32.gmra.mrb[0].mxu0 %v1063
    %v1491 = vpop.f32.mrb[0].mxu0
    %v1492 = vadd.f32 %v827, %v1491
    %v1493 = vpop.f32.mrb[0].mxu0
    %1494 = vmatprep.mubr.f32.mxu0 0.0
    %1495 = vmatmul.mubr.f32.gmra.mrb[0].mxu0 %v1066
    %v1496 = vpop.f32.mrb[0].mxu0
    %v1497 = vadd.f32 %v832, %v1496
    %v1498 = vpop.f32.mrb[0].mxu0
    %1499 = vmatprep.mubr.f32.mxu0 0.0
    %1500 = vmatmul.mubr.f32.gmra.mrb[0].mxu0 %v1069
    %v1501 = vpop.f32.mrb[0].mxu0
    %v1502 = vadd.f32 %v837, %v1501
    %v1503 = vpop.f32.mrb[0].mxu0
    %1504 = vmatprep.mubr.f32.mxu0 0.0
    %1505 = vmatmul.mubr.f32.gmra.mrb[0].mxu0 %v1072
    %v1506 = vpop.f32.mrb[0].mxu0
    %v1507 = vadd.f32 %v842, %v1506
    %v1508 = vpop.f32.mrb[0].mxu0
    %1509 = vmatprep.mubr.f32.mxu0 0.0
    %1510 = vmatmul.mubr.f32.gmra.mrb[0].mxu0 %v1075
    %v1511 = vpop.f32.mrb[0].mxu0
    %v1512 = vadd.f32 %v847, %v1511
    %v1513 = vpop.f32.mrb[0].mxu0
    %1514 = vmatprep.mubr.f32.mxu0 0.0
    %1515 = vmatmul.mubr.f32.gmra.mrb[0].mxu0 %v1078
    %v1516 = vpop.f32.mrb[0].mxu0
    %v1517 = vadd.f32 %v852, %v1516
    %v1518 = vpop.f32.mrb[0].mxu0
    %1519 = vdwg.mxu0
    %v1520 = vld [vmem:[%s2] sm:$0xff]
    %v1521 = vld [vmem:[%s2 + $0x8] sm:$0xff]
    %v1522 = vld [vmem:[%s2 + $0x10] sm:$0xff]
    %v1523 = vld [vmem:[%s2 + $0x18] sm:$0xff]
    %v1524 = vld [vmem:[%s2 + $0x20] sm:$0xff]
    %v1525 = vld [vmem:[%s2 + $0x28] sm:$0xff]
    %v1526 = vld [vmem:[%s2 + $0x30] sm:$0xff]
    %v1527 = vld [vmem:[%s2 + $0x38] sm:$0xff]
    %v1528 = vld [vmem:[%s2 + $0x40] sm:$0xff]
    %v1529 = vld [vmem:[%s2 + $0x48] sm:$0xff]
    %v1530 = vld [vmem:[%s2 + $0x50] sm:$0xff]
    %v1531 = vld [vmem:[%s2 + $0x58] sm:$0xff]
    %v1532 = vld [vmem:[%s2 + $0x60] sm:$0xff]
    %v1533 = vld [vmem:[%s2 + $0x68] sm:$0xff]
    %v1534 = vld [vmem:[%s2 + $0x70] sm:$0xff]
    %v1535 = vld [vmem:[%s2 + $0x78] sm:$0xff]
    %v1536 = vld [vmem:[%s2 + $0x80] sm:$0xff]
    %v1537 = vld [vmem:[%s2 + $0x88] sm:$0xff]
    %v1538 = vld [vmem:[%s2 + $0x90] sm:$0xff]
    %v1539 = vld [vmem:[%s2 + $0x98] sm:$0xff]
    %v1540 = vld [vmem:[%s2 + $0xa0] sm:$0xff]
    %v1541 = vld [vmem:[%s2 + $0xa8] sm:$0xff]
    %v1542 = vld [vmem:[%s2 + $0xb0] sm:$0xff]
    %v1543 = vld [vmem:[%s2 + $0xb8] sm:$0xff]
    %v1544 = vld [vmem:[%s2 + $0xc0] sm:$0xff]
    %v1545 = vld [vmem:[%s2 + $0xc8] sm:$0xff]
    %v1546 = vld [vmem:[%s2 + $0xd0] sm:$0xff]
    %v1547 = vld [vmem:[%s2 + $0xd8] sm:$0xff]
    %v1548 = vld [vmem:[%s2 + $0xe0] sm:$0xff]
    %v1549 = vld [vmem:[%s2 + $0xe8] sm:$0xff]
    %v1550 = vld [vmem:[%s2 + $0xf0] sm:$0xff]
    %v1551 = vld [vmem:[%s2 + $0xf8] sm:$0xff]
    %v1552 = vld [vmem:[%s2 + $0x100] sm:$0xff]
    %v1553 = vld [vmem:[%s2 + $0x108] sm:$0xff]
    %v1554 = vld [vmem:[%s2 + $0x110] sm:$0xff]
    %v1555 = vld [vmem:[%s2 + $0x118] sm:$0xff]
    %v1556 = vld [vmem:[%s2 + $0x120] sm:$0xff]
    %v1557 = vld [vmem:[%s2 + $0x128] sm:$0xff]
    %v1558 = vld [vmem:[%s2 + $0x130] sm:$0xff]
    %v1559 = vld [vmem:[%s2 + $0x138] sm:$0xff]
    %v1560 = vld [vmem:[%s2 + $0x140] sm:$0xff]
    %v1561 = vld [vmem:[%s2 + $0x148] sm:$0xff]
    %v1562 = vld [vmem:[%s2 + $0x150] sm:$0xff]
    %v1563 = vld [vmem:[%s2 + $0x158] sm:$0xff]
    %v1564 = vld [vmem:[%s2 + $0x160] sm:$0xff]
    %v1565 = vld [vmem:[%s2 + $0x168] sm:$0xff]
    %v1566 = vld [vmem:[%s2 + $0x170] sm:$0xff]
    %v1567 = vld [vmem:[%s2 + $0x178] sm:$0xff]
    %v1568 = vld [vmem:[%s2 + $0x180] sm:$0xff]
    %v1569 = vld [vmem:[%s2 + $0x188] sm:$0xff]
    %v1570 = vld [vmem:[%s2 + $0x190] sm:$0xff]
    %v1571 = vld [vmem:[%s2 + $0x198] sm:$0xff]
    %v1572 = vld [vmem:[%s2 + $0x1a0] sm:$0xff]
    %v1573 = vld [vmem:[%s2 + $0x1a8] sm:$0xff]
    %v1574 = vld [vmem:[%s2 + $0x1b0] sm:$0xff]
    %v1575 = vld [vmem:[%s2 + $0x1b8] sm:$0xff]
    %v1576 = vld [vmem:[%s2 + $0x1c0] sm:$0xff]
    %v1577 = vld [vmem:[%s2 + $0x1c8] sm:$0xff]
    %v1578 = vld [vmem:[%s2 + $0x1d0] sm:$0xff]
    %v1579 = vld [vmem:[%s2 + $0x1d8] sm:$0xff]
    %v1580 = vld [vmem:[%s2 + $0x1e0] sm:$0xff]
    %v1581 = vld [vmem:[%s2 + $0x1e8] sm:$0xff]
    %v1582 = vld [vmem:[%s2 + $0x1f0] sm:$0xff]
    %v1583 = vld [vmem:[%s2 + $0x1f8] sm:$0xff]
    %v1584 = vld [vmem:[%s2 + $0x200] sm:$0xff]
    %v1585 = vld [vmem:[%s2 + $0x208] sm:$0xff]
    %v1586 = vld [vmem:[%s2 + $0x210] sm:$0xff]
    %v1587 = vld [vmem:[%s2 + $0x218] sm:$0xff]
    %v1588 = vld [vmem:[%s2 + $0x220] sm:$0xff]
    %v1589 = vld [vmem:[%s2 + $0x228] sm:$0xff]
    %v1590 = vld [vmem:[%s2 + $0x230] sm:$0xff]
    %v1591 = vld [vmem:[%s2 + $0x238] sm:$0xff]
    %v1592 = vld [vmem:[%s2 + $0x240] sm:$0xff]
    %v1593 = vld [vmem:[%s2 + $0x248] sm:$0xff]
    %v1594 = vld [vmem:[%s2 + $0x250] sm:$0xff]
    %v1595 = vld [vmem:[%s5] sm:$0xff]
    %v1596 = vld [vmem:[%s5 + $0x8] sm:$0xff]
    %v1597 = vld [vmem:[%s5 + $0x10] sm:$0xff]
    %v1598 = vld [vmem:[%s5 + $0x18] sm:$0xff]
    %v1599 = vld [vmem:[%s5 + $0x20] sm:$0x1]
    %vm1600 = vcmask 269312
    %v1602 = vsel %vm1600, %v1520, 0
    %v1605 = vsel %vm1600, %v1521, 0
    %v1608 = vsel %vm1600, %v1522, 0
    %v1611 = vsel %vm1600, %v1523, 0
    %v1614 = vsel %vm1600, %v1524, 0
    %v1617 = vsel %vm1600, %v1525, 0
    %v1620 = vsel %vm1600, %v1526, 0
    %v1623 = vsel %vm1600, %v1527, 0
    %v1626 = vsel %vm1600, %v1528, 0
    %v1629 = vsel %vm1600, %v1529, 0
    %v1632 = vsel %vm1600, %v1530, 0
    %v1635 = vsel %vm1600, %v1531, 0
    %v1638 = vsel %vm1600, %v1532, 0
    %v1641 = vsel %vm1600, %v1533, 0
    %v1644 = vsel %vm1600, %v1534, 0
    %v1647 = vsel %vm1600, %v1535, 0
    %v1650 = vsel %vm1600, %v1536, 0
    %v1653 = vsel %vm1600, %v1537, 0
    %v1656 = vsel %vm1600, %v1538, 0
    %v1659 = vsel %vm1600, %v1539, 0
    %v1662 = vsel %vm1600, %v1540, 0
    %v1665 = vsel %vm1600, %v1541, 0
    %v1668 = vsel %vm1600, %v1542, 0
    %v1671 = vsel %vm1600, %v1543, 0
    %v1674 = vsel %vm1600, %v1544, 0
    %v1677 = vsel %vm1600, %v1545, 0
    %v1680 = vsel %vm1600, %v1546, 0
    %v1683 = vsel %vm1600, %v1547, 0
    %v1686 = vsel %vm1600, %v1548, 0
    %v1689 = vsel %vm1600, %v1549, 0
    %v1692 = vsel %vm1600, %v1550, 0
    %v1695 = vsel %vm1600, %v1551, 0
    %v1698 = vsel %vm1600, %v1552, 0
    %v1701 = vsel %vm1600, %v1553, 0
    %v1704 = vsel %vm1600, %v1554, 0
    %v1707 = vsel %vm1600, %v1555, 0
    %v1710 = vsel %vm1600, %v1556, 0
    %v1713 = vsel %vm1600, %v1557, 0
    %v1716 = vsel %vm1600, %v1558, 0
    %v1719 = vsel %vm1600, %v1559, 0
    %v1722 = vsel %vm1600, %v1560, 0
    %v1725 = vsel %vm1600, %v1561, 0
    %v1728 = vsel %vm1600, %v1562, 0
    %v1731 = vsel %vm1600, %v1563, 0
    %v1734 = vsel %vm1600, %v1564, 0
    %v1737 = vsel %vm1600, %v1565, 0
    %v1740 = vsel %vm1600, %v1566, 0
    %v1743 = vsel %vm1600, %v1567, 0
    %v1746 = vsel %vm1600, %v1568, 0
    %v1749 = vsel %vm1600, %v1569, 0
    %v1752 = vsel %vm1600, %v1570, 0
    %v1755 = vsel %vm1600, %v1571, 0
    %v1758 = vsel %vm1600, %v1572, 0
    %v1761 = vsel %vm1600, %v1573, 0
    %v1764 = vsel %vm1600, %v1574, 0
    %v1767 = vsel %vm1600, %v1575, 0
    %v1770 = vsel %vm1600, %v1576, 0
    %v1773 = vsel %vm1600, %v1577, 0
    %v1776 = vsel %vm1600, %v1578, 0
    %v1779 = vsel %vm1600, %v1579, 0
    %v1782 = vsel %vm1600, %v1580, 0
    %v1785 = vsel %vm1600, %v1581, 0
    %v1788 = vsel %vm1600, %v1582, 0
    %v1791 = vsel %vm1600, %v1583, 0
    %v1794 = vsel %vm1600, %v1584, 0
    %v1797 = vsel %vm1600, %v1585, 0
    %v1800 = vsel %vm1600, %v1586, 0
    %v1803 = vsel %vm1600, %v1587, 0
    %v1806 = vsel %vm1600, %v1588, 0
    %v1809 = vsel %vm1600, %v1589, 0
    %v1812 = vsel %vm1600, %v1590, 0
    %v1815 = vsel %vm1600, %v1591, 0
    %v1818 = vsel %vm1600, %v1592, 0
    %v1821 = vsel %vm1600, %v1593, 0
    %v1824 = vsel %vm1600, %v1594, 0
    %vm1826 = vcmask 1040384
    %v1828 = vsel %vm1826, %v1599, 0
    %1830 = vmatprep.subr.mxu0 0.0
    %1831 = vmatpush1.msra.mxu0 %v1595
    %1832 = vmatprep.subr.mxu0 0.0
    %1833 = vmatpush1.msra.mxu0 %v1596
    %1834 = vmatprep.subr.mxu0 0.0
    %1835 = vmatpush1.msra.mxu0 %v1597
    %1836 = vmatprep.subr.mxu0 0.0
    %1837 = vmatpush1.msra.mxu0 %v1598
    %1838 = vmatprep.subr.mxu0 0.0
    %1839 = vmatpush1.msra.mxu0 %v1828
    %1840 = vmatprep.subr.mxu0 0.0
    %1841 = vmatpush1.msra.mxu0 0.0
    %1842 = vmatprep.subr.mxu0 0.0
    %1843 = vmatpush1.msra.mxu0 0.0
    %1844 = vmatprep.subr.mxu0 0.0
    %1845 = vmatpush1.msra.mxu0 0.0
    %1846 = vmatprep.subr.mxu0 0.0
    %1847 = vmatpush1.msra.mxu0 0.0
    %1848 = vmatprep.subr.mxu0 0.0
    %1849 = vmatpush1.msra.mxu0 0.0
    %1850 = vmatprep.subr.mxu0 0.0
    %1851 = vmatpush1.msra.mxu0 0.0
    %1852 = vmatprep.subr.mxu0 0.0
    %1853 = vmatpush1.msra.mxu0 0.0
    %1854 = vmatprep.subr.mxu0 0.0
    %1855 = vmatpush1.msra.mxu0 0.0
    %1856 = vmatprep.subr.mxu0 0.0
    %1857 = vmatpush1.msra.mxu0 0.0
    %1858 = vmatprep.subr.mxu0 0.0
    %1859 = vmatpush1.msra.mxu0 0.0
    %1860 = vmatprep.subr.mxu0 0.0
    %1861 = vmatpush1.msra.mxu0 0.0
    %1862 = vmatprep.subr.mxu0 0.0
    %1863 = vmatpush1.msra.mxu0 0.0
    %1864 = vmatprep.subr.mxu0 0.0
    %1865 = vmatpush1.msra.mxu0 0.0
    %1866 = vmatprep.subr.mxu0 0.0
    %1867 = vmatpush1.msra.mxu0 0.0
    %1868 = vmatprep.subr.mxu0 0.0
    %1869 = vmatpush1.msra.mxu0 0.0
    %1870 = vmatprep.subr.mxu0 0.0
    %1871 = vmatpush1.msra.mxu0 0.0
    %1872 = vmatprep.subr.mxu0 0.0
    %1873 = vmatpush1.msra.mxu0 0.0
    %1874 = vmatprep.subr.mxu0 0.0
    %1875 = vmatpush1.msra.mxu0 0.0
    %1876 = vmatprep.subr.mxu0 0.0
    %1877 = vmatpush1.msra.mxu0 0.0
    %1878 = vmatprep.subr.mxu0 0.0
    %1879 = vmatpush1.msra.mxu0 0.0
    %1880 = vmatprep.subr.mxu0 0.0
    %1881 = vmatpush1.msra.mxu0 0.0
    %1882 = vmatprep.subr.mxu0 0.0
    %1883 = vmatpush1.msra.mxu0 0.0
    %1884 = vmatprep.subr.mxu0 0.0
    %1885 = vmatpush1.msra.mxu0 0.0
    %1886 = vmatprep.subr.mxu0 0.0
    %1887 = vmatpush1.msra.mxu0 0.0
    %1888 = vmatprep.subr.mxu0 0.0
    %1889 = vmatpush1.msra.mxu0 0.0
    %1890 = vmatprep.subr.mxu0 0.0
    %1891 = vmatpush1.msra.mxu0 0.0
    %1892 = vmatprep.subr.mxu0 0.0
    %1893 = vmatpush1.msra.mxu0 0.0
    %1894 = vmatprep.mubr.f32.mxu0 0.0
    %1895 = vmatmul.mubr.f32.gmra.mrb[0].mxu0 %v1602
    %v1896 = vpop.f32.mrb[0].mxu0
    %v1897 = vadd.f32 0.0, %v1896
    %v1898 = vpop.f32.mrb[0].mxu0
    %1899 = vmatprep.mubr.f32.mxu0 0.0
    %1900 = vmatmul.mubr.f32.gmra.mrb[0].mxu0 %v1605
    %v1901 = vpop.f32.mrb[0].mxu0
    %v1902 = vadd.f32 0.0, %v1901
    %v1903 = vpop.f32.mrb[0].mxu0
    %1904 = vmatprep.mubr.f32.mxu0 0.0
    %1905 = vmatmul.mubr.f32.gmra.mrb[0].mxu0 %v1608
    %v1906 = vpop.f32.mrb[0].mxu0
    %v1907 = vadd.f32 0.0, %v1906
    %v1908 = vpop.f32.mrb[0].mxu0
    %1909 = vmatprep.mubr.f32.mxu0 0.0
    %1910 = vmatmul.mubr.f32.gmra.mrb[0].mxu0 %v1611
    %v1911 = vpop.f32.mrb[0].mxu0
    %v1912 = vadd.f32 0.0, %v1911
    %v1913 = vpop.f32.mrb[0].mxu0
    %1914 = vmatprep.mubr.f32.mxu0 0.0
    %1915 = vmatmul.mubr.f32.gmra.mrb[0].mxu0 %v1614
    %v1916 = vpop.f32.mrb[0].mxu0
    %v1917 = vadd.f32 0.0, %v1916
    %v1918 = vpop.f32.mrb[0].mxu0
    %1919 = vmatprep.mubr.f32.mxu0 0.0
    %1920 = vmatmul.mubr.f32.gmra.mrb[0].mxu0 %v1617
    %v1921 = vpop.f32.mrb[0].mxu0
    %v1922 = vadd.f32 0.0, %v1921
    %v1923 = vpop.f32.mrb[0].mxu0
    %1924 = vmatprep.mubr.f32.mxu0 0.0
    %1925 = vmatmul.mubr.f32.gmra.mrb[0].mxu0 %v1620
    %v1926 = vpop.f32.mrb[0].mxu0
    %v1927 = vadd.f32 0.0, %v1926
    %v1928 = vpop.f32.mrb[0].mxu0
    %1929 = vmatprep.mubr.f32.mxu0 0.0
    %1930 = vmatmul.mubr.f32.gmra.mrb[0].mxu0 %v1623
    %v1931 = vpop.f32.mrb[0].mxu0
    %v1932 = vadd.f32 0.0, %v1931
    %v1933 = vpop.f32.mrb[0].mxu0
    %1934 = vmatprep.mubr.f32.mxu0 0.0
    %1935 = vmatmul.mubr.f32.gmra.mrb[0].mxu0 %v1626
    %v1936 = vpop.f32.mrb[0].mxu0
    %v1937 = vadd.f32 0.0, %v1936
    %v1938 = vpop.f32.mrb[0].mxu0
    %1939 = vmatprep.mubr.f32.mxu0 0.0
    %1940 = vmatmul.mubr.f32.gmra.mrb[0].mxu0 %v1629
    %v1941 = vpop.f32.mrb[0].mxu0
    %v1942 = vadd.f32 0.0, %v1941
    %v1943 = vpop.f32.mrb[0].mxu0
    %1944 = vmatprep.mubr.f32.mxu0 0.0
    %1945 = vmatmul.mubr.f32.gmra.mrb[0].mxu0 %v1632
    %v1946 = vpop.f32.mrb[0].mxu0
    %v1947 = vadd.f32 0.0, %v1946
    %v1948 = vpop.f32.mrb[0].mxu0
    %1949 = vmatprep.mubr.f32.mxu0 0.0
    %1950 = vmatmul.mubr.f32.gmra.mrb[0].mxu0 %v1635
    %v1951 = vpop.f32.mrb[0].mxu0
    %v1952 = vadd.f32 0.0, %v1951
    %v1953 = vpop.f32.mrb[0].mxu0
    %1954 = vmatprep.mubr.f32.mxu0 0.0
    %1955 = vmatmul.mubr.f32.gmra.mrb[0].mxu0 %v1638
    %v1956 = vpop.f32.mrb[0].mxu0
    %v1957 = vadd.f32 0.0, %v1956
    %v1958 = vpop.f32.mrb[0].mxu0
    %1959 = vmatprep.mubr.f32.mxu0 0.0
    %1960 = vmatmul.mubr.f32.gmra.mrb[0].mxu0 %v1641
    %v1961 = vpop.f32.mrb[0].mxu0
    %v1962 = vadd.f32 0.0, %v1961
    %v1963 = vpop.f32.mrb[0].mxu0
    %1964 = vmatprep.mubr.f32.mxu0 0.0
    %1965 = vmatmul.mubr.f32.gmra.mrb[0].mxu0 %v1644
    %v1966 = vpop.f32.mrb[0].mxu0
    %v1967 = vadd.f32 0.0, %v1966
    %v1968 = vpop.f32.mrb[0].mxu0
    %1969 = vmatprep.mubr.f32.mxu0 0.0
    %1970 = vmatmul.mubr.f32.gmra.mrb[0].mxu0 %v1647
    %v1971 = vpop.f32.mrb[0].mxu0
    %v1972 = vadd.f32 0.0, %v1971
    %v1973 = vpop.f32.mrb[0].mxu0
    %1974 = vmatprep.mubr.f32.mxu0 0.0
    %1975 = vmatmul.mubr.f32.gmra.mrb[0].mxu0 %v1650
    %v1976 = vpop.f32.mrb[0].mxu0
    %v1977 = vadd.f32 0.0, %v1976
    %v1978 = vpop.f32.mrb[0].mxu0
    %1979 = vmatprep.mubr.f32.mxu0 0.0
    %1980 = vmatmul.mubr.f32.gmra.mrb[0].mxu0 %v1653
    %v1981 = vpop.f32.mrb[0].mxu0
    %v1982 = vadd.f32 0.0, %v1981
    %v1983 = vpop.f32.mrb[0].mxu0
    %1984 = vmatprep.mubr.f32.mxu0 0.0
    %1985 = vmatmul.mubr.f32.gmra.mrb[0].mxu0 %v1656
    %v1986 = vpop.f32.mrb[0].mxu0
    %v1987 = vadd.f32 0.0, %v1986
    %v1988 = vpop.f32.mrb[0].mxu0
    %1989 = vmatprep.mubr.f32.mxu0 0.0
    %1990 = vmatmul.mubr.f32.gmra.mrb[0].mxu0 %v1659
    %v1991 = vpop.f32.mrb[0].mxu0
    %v1992 = vadd.f32 0.0, %v1991
    %v1993 = vpop.f32.mrb[0].mxu0
    %1994 = vmatprep.mubr.f32.mxu0 0.0
    %1995 = vmatmul.mubr.f32.gmra.mrb[0].mxu0 %v1662
    %v1996 = vpop.f32.mrb[0].mxu0
    %v1997 = vadd.f32 0.0, %v1996
    %v1998 = vpop.f32.mrb[0].mxu0
    %1999 = vmatprep.mubr.f32.mxu0 0.0
    %2000 = vmatmul.mubr.f32.gmra.mrb[0].mxu0 %v1665
    %v2001 = vpop.f32.mrb[0].mxu0
    %v2002 = vadd.f32 0.0, %v2001
    %v2003 = vpop.f32.mrb[0].mxu0
    %2004 = vmatprep.mubr.f32.mxu0 0.0
    %2005 = vmatmul.mubr.f32.gmra.mrb[0].mxu0 %v1668
    %v2006 = vpop.f32.mrb[0].mxu0
    %v2007 = vadd.f32 0.0, %v2006
    %v2008 = vpop.f32.mrb[0].mxu0
    %2009 = vmatprep.mubr.f32.mxu0 0.0
    %2010 = vmatmul.mubr.f32.gmra.mrb[0].mxu0 %v1671
    %v2011 = vpop.f32.mrb[0].mxu0
    %v2012 = vadd.f32 0.0, %v2011
    %v2013 = vpop.f32.mrb[0].mxu0
    %2014 = vmatprep.mubr.f32.mxu0 0.0
    %2015 = vmatmul.mubr.f32.gmra.mrb[0].mxu0 %v1674
    %v2016 = vpop.f32.mrb[0].mxu0
    %v2017 = vadd.f32 0.0, %v2016
    %v2018 = vpop.f32.mrb[0].mxu0
    %2019 = vmatprep.mubr.f32.mxu0 0.0
    %2020 = vmatmul.mubr.f32.gmra.mrb[0].mxu0 %v1677
    %v2021 = vpop.f32.mrb[0].mxu0
    %v2022 = vadd.f32 0.0, %v2021
    %v2023 = vpop.f32.mrb[0].mxu0
    %2024 = vmatprep.mubr.f32.mxu0 0.0
    %2025 = vmatmul.mubr.f32.gmra.mrb[0].mxu0 %v1680
    %v2026 = vpop.f32.mrb[0].mxu0
    %v2027 = vadd.f32 0.0, %v2026
    %v2028 = vpop.f32.mrb[0].mxu0
    %2029 = vmatprep.mubr.f32.mxu0 0.0
    %2030 = vmatmul.mubr.f32.gmra.mrb[0].mxu0 %v1683
    %v2031 = vpop.f32.mrb[0].mxu0
    %v2032 = vadd.f32 0.0, %v2031
    %v2033 = vpop.f32.mrb[0].mxu0
    %2034 = vmatprep.mubr.f32.mxu0 0.0
    %2035 = vmatmul.mubr.f32.gmra.mrb[0].mxu0 %v1686
    %v2036 = vpop.f32.mrb[0].mxu0
    %v2037 = vadd.f32 0.0, %v2036
    %v2038 = vpop.f32.mrb[0].mxu0
    %2039 = vmatprep.mubr.f32.mxu0 0.0
    %2040 = vmatmul.mubr.f32.gmra.mrb[0].mxu0 %v1689
    %v2041 = vpop.f32.mrb[0].mxu0
    %v2042 = vadd.f32 0.0, %v2041
    %v2043 = vpop.f32.mrb[0].mxu0
    %2044 = vmatprep.mubr.f32.mxu0 0.0
    %2045 = vmatmul.mubr.f32.gmra.mrb[0].mxu0 %v1692
    %v2046 = vpop.f32.mrb[0].mxu0
    %v2047 = vadd.f32 0.0, %v2046
    %v2048 = vpop.f32.mrb[0].mxu0
    %2049 = vmatprep.mubr.f32.mxu0 0.0
    %2050 = vmatmul.mubr.f32.gmra.mrb[0].mxu0 %v1695
    %v2051 = vpop.f32.mrb[0].mxu0
    %v2052 = vadd.f32 0.0, %v2051
    %v2053 = vpop.f32.mrb[0].mxu0
    %2054 = vmatprep.mubr.f32.mxu0 0.0
    %2055 = vmatmul.mubr.f32.gmra.mrb[0].mxu0 %v1698
    %v2056 = vpop.f32.mrb[0].mxu0
    %v2057 = vadd.f32 0.0, %v2056
    %v2058 = vpop.f32.mrb[0].mxu0
    %2059 = vmatprep.mubr.f32.mxu0 0.0
    %2060 = vmatmul.mubr.f32.gmra.mrb[0].mxu0 %v1701
    %v2061 = vpop.f32.mrb[0].mxu0
    %v2062 = vadd.f32 0.0, %v2061
    %v2063 = vpop.f32.mrb[0].mxu0
    %2064 = vmatprep.mubr.f32.mxu0 0.0
    %2065 = vmatmul.mubr.f32.gmra.mrb[0].mxu0 %v1704
    %v2066 = vpop.f32.mrb[0].mxu0
    %v2067 = vadd.f32 0.0, %v2066
    %v2068 = vpop.f32.mrb[0].mxu0
    %2069 = vmatprep.mubr.f32.mxu0 0.0
    %2070 = vmatmul.mubr.f32.gmra.mrb[0].mxu0 %v1707
    %v2071 = vpop.f32.mrb[0].mxu0
    %v2072 = vadd.f32 0.0, %v2071
    %v2073 = vpop.f32.mrb[0].mxu0
    %2074 = vmatprep.mubr.f32.mxu0 0.0
    %2075 = vmatmul.mubr.f32.gmra.mrb[0].mxu0 %v1710
    %v2076 = vpop.f32.mrb[0].mxu0
    %v2077 = vadd.f32 0.0, %v2076
    %v2078 = vpop.f32.mrb[0].mxu0
    %2079 = vmatprep.mubr.f32.mxu0 0.0
    %2080 = vmatmul.mubr.f32.gmra.mrb[0].mxu0 %v1713
    %v2081 = vpop.f32.mrb[0].mxu0
    %v2082 = vadd.f32 0.0, %v2081
    %v2083 = vpop.f32.mrb[0].mxu0
    %2084 = vmatprep.mubr.f32.mxu0 0.0
    %2085 = vmatmul.mubr.f32.gmra.mrb[0].mxu0 %v1716
    %v2086 = vpop.f32.mrb[0].mxu0
    %v2087 = vadd.f32 0.0, %v2086
    %v2088 = vpop.f32.mrb[0].mxu0
    %2089 = vmatprep.mubr.f32.mxu0 0.0
    %2090 = vmatmul.mubr.f32.gmra.mrb[0].mxu0 %v1719
    %v2091 = vpop.f32.mrb[0].mxu0
    %v2092 = vadd.f32 0.0, %v2091
    %v2093 = vpop.f32.mrb[0].mxu0
    %2094 = vmatprep.mubr.f32.mxu0 0.0
    %2095 = vmatmul.mubr.f32.gmra.mrb[0].mxu0 %v1722
    %v2096 = vpop.f32.mrb[0].mxu0
    %v2097 = vadd.f32 0.0, %v2096
    %v2098 = vpop.f32.mrb[0].mxu0
    %2099 = vmatprep.mubr.f32.mxu0 0.0
    %2100 = vmatmul.mubr.f32.gmra.mrb[0].mxu0 %v1725
    %v2101 = vpop.f32.mrb[0].mxu0
    %v2102 = vadd.f32 0.0, %v2101
    %v2103 = vpop.f32.mrb[0].mxu0
    %2104 = vmatprep.mubr.f32.mxu0 0.0
    %2105 = vmatmul.mubr.f32.gmra.mrb[0].mxu0 %v1728
    %v2106 = vpop.f32.mrb[0].mxu0
    %v2107 = vadd.f32 0.0, %v2106
    %v2108 = vpop.f32.mrb[0].mxu0
    %2109 = vmatprep.mubr.f32.mxu0 0.0
    %2110 = vmatmul.mubr.f32.gmra.mrb[0].mxu0 %v1731
    %v2111 = vpop.f32.mrb[0].mxu0
    %v2112 = vadd.f32 0.0, %v2111
    %v2113 = vpop.f32.mrb[0].mxu0
    %2114 = vmatprep.mubr.f32.mxu0 0.0
    %2115 = vmatmul.mubr.f32.gmra.mrb[0].mxu0 %v1734
    %v2116 = vpop.f32.mrb[0].mxu0
    %v2117 = vadd.f32 0.0, %v2116
    %v2118 = vpop.f32.mrb[0].mxu0
    %2119 = vmatprep.mubr.f32.mxu0 0.0
    %2120 = vmatmul.mubr.f32.gmra.mrb[0].mxu0 %v1737
    %v2121 = vpop.f32.mrb[0].mxu0
    %v2122 = vadd.f32 0.0, %v2121
    %v2123 = vpop.f32.mrb[0].mxu0
    %2124 = vmatprep.mubr.f32.mxu0 0.0
    %2125 = vmatmul.mubr.f32.gmra.mrb[0].mxu0 %v1740
    %v2126 = vpop.f32.mrb[0].mxu0
    %v2127 = vadd.f32 0.0, %v2126
    %v2128 = vpop.f32.mrb[0].mxu0
    %2129 = vmatprep.mubr.f32.mxu0 0.0
    %2130 = vmatmul.mubr.f32.gmra.mrb[0].mxu0 %v1743
    %v2131 = vpop.f32.mrb[0].mxu0
    %v2132 = vadd.f32 0.0, %v2131
    %v2133 = vpop.f32.mrb[0].mxu0
    %2134 = vmatprep.mubr.f32.mxu0 0.0
    %2135 = vmatmul.mubr.f32.gmra.mrb[0].mxu0 %v1746
    %v2136 = vpop.f32.mrb[0].mxu0
    %v2137 = vadd.f32 0.0, %v2136
    %v2138 = vpop.f32.mrb[0].mxu0
    %2139 = vmatprep.mubr.f32.mxu0 0.0
    %2140 = vmatmul.mubr.f32.gmra.mrb[0].mxu0 %v1749
    %v2141 = vpop.f32.mrb[0].mxu0
    %v2142 = vadd.f32 0.0, %v2141
    %v2143 = vpop.f32.mrb[0].mxu0
    %2144 = vmatprep.mubr.f32.mxu0 0.0
    %2145 = vmatmul.mubr.f32.gmra.mrb[0].mxu0 %v1752
    %v2146 = vpop.f32.mrb[0].mxu0
    %v2147 = vadd.f32 0.0, %v2146
    %v2148 = vpop.f32.mrb[0].mxu0
    %2149 = vmatprep.mubr.f32.mxu0 0.0
    %2150 = vmatmul.mubr.f32.gmra.mrb[0].mxu0 %v1755
    %v2151 = vpop.f32.mrb[0].mxu0
    %v2152 = vadd.f32 0.0, %v2151
    %v2153 = vpop.f32.mrb[0].mxu0
    %2154 = vmatprep.mubr.f32.mxu0 0.0
    %2155 = vmatmul.mubr.f32.gmra.mrb[0].mxu0 %v1758
    %v2156 = vpop.f32.mrb[0].mxu0
    %v2157 = vadd.f32 0.0, %v2156
    %v2158 = vpop.f32.mrb[0].mxu0
    %2159 = vmatprep.mubr.f32.mxu0 0.0
    %2160 = vmatmul.mubr.f32.gmra.mrb[0].mxu0 %v1761
    %v2161 = vpop.f32.mrb[0].mxu0
    %v2162 = vadd.f32 0.0, %v2161
    %v2163 = vpop.f32.mrb[0].mxu0
    %2164 = vmatprep.mubr.f32.mxu0 0.0
    %2165 = vmatmul.mubr.f32.gmra.mrb[0].mxu0 %v1764
    %v2166 = vpop.f32.mrb[0].mxu0
    %v2167 = vadd.f32 0.0, %v2166
    %v2168 = vpop.f32.mrb[0].mxu0
    %2169 = vmatprep.mubr.f32.mxu0 0.0
    %2170 = vmatmul.mubr.f32.gmra.mrb[0].mxu0 %v1767
    %v2171 = vpop.f32.mrb[0].mxu0
    %v2172 = vadd.f32 0.0, %v2171
    %v2173 = vpop.f32.mrb[0].mxu0
    %2174 = vmatprep.mubr.f32.mxu0 0.0
    %2175 = vmatmul.mubr.f32.gmra.mrb[0].mxu0 %v1770
    %v2176 = vpop.f32.mrb[0].mxu0
    %v2177 = vadd.f32 0.0, %v2176
    %v2178 = vpop.f32.mrb[0].mxu0
    %2179 = vmatprep.mubr.f32.mxu0 0.0
    %2180 = vmatmul.mubr.f32.gmra.mrb[0].mxu0 %v1773
    %v2181 = vpop.f32.mrb[0].mxu0
    %v2182 = vadd.f32 0.0, %v2181
    %v2183 = vpop.f32.mrb[0].mxu0
    %2184 = vmatprep.mubr.f32.mxu0 0.0
    %2185 = vmatmul.mubr.f32.gmra.mrb[0].mxu0 %v1776
    %v2186 = vpop.f32.mrb[0].mxu0
    %v2187 = vadd.f32 0.0, %v2186
    %v2188 = vpop.f32.mrb[0].mxu0
    %2189 = vmatprep.mubr.f32.mxu0 0.0
    %2190 = vmatmul.mubr.f32.gmra.mrb[0].mxu0 %v1779
    %v2191 = vpop.f32.mrb[0].mxu0
    %v2192 = vadd.f32 0.0, %v2191
    %v2193 = vpop.f32.mrb[0].mxu0
    %2194 = vmatprep.mubr.f32.mxu0 0.0
    %2195 = vmatmul.mubr.f32.gmra.mrb[0].mxu0 %v1782
    %v2196 = vpop.f32.mrb[0].mxu0
    %v2197 = vadd.f32 0.0, %v2196
    %v2198 = vpop.f32.mrb[0].mxu0
    %2199 = vmatprep.mubr.f32.mxu0 0.0
    %2200 = vmatmul.mubr.f32.gmra.mrb[0].mxu0 %v1785
    %v2201 = vpop.f32.mrb[0].mxu0
    %v2202 = vadd.f32 0.0, %v2201
    %v2203 = vpop.f32.mrb[0].mxu0
    %2204 = vmatprep.mubr.f32.mxu0 0.0
    %2205 = vmatmul.mubr.f32.gmra.mrb[0].mxu0 %v1788
    %v2206 = vpop.f32.mrb[0].mxu0
    %v2207 = vadd.f32 0.0, %v2206
    %v2208 = vpop.f32.mrb[0].mxu0
    %2209 = vmatprep.mubr.f32.mxu0 0.0
    %2210 = vmatmul.mubr.f32.gmra.mrb[0].mxu0 %v1791
    %v2211 = vpop.f32.mrb[0].mxu0
    %v2212 = vadd.f32 0.0, %v2211
    %v2213 = vpop.f32.mrb[0].mxu0
    %2214 = vmatprep.mubr.f32.mxu0 0.0
    %2215 = vmatmul.mubr.f32.gmra.mrb[0].mxu0 %v1794
    %v2216 = vpop.f32.mrb[0].mxu0
    %v2217 = vadd.f32 0.0, %v2216
    %v2218 = vpop.f32.mrb[0].mxu0
    %2219 = vmatprep.mubr.f32.mxu0 0.0
    %2220 = vmatmul.mubr.f32.gmra.mrb[0].mxu0 %v1797
    %v2221 = vpop.f32.mrb[0].mxu0
    %v2222 = vadd.f32 0.0, %v2221
    %v2223 = vpop.f32.mrb[0].mxu0
    %2224 = vmatprep.mubr.f32.mxu0 0.0
    %2225 = vmatmul.mubr.f32.gmra.mrb[0].mxu0 %v1800
    %v2226 = vpop.f32.mrb[0].mxu0
    %v2227 = vadd.f32 0.0, %v2226
    %v2228 = vpop.f32.mrb[0].mxu0
    %2229 = vmatprep.mubr.f32.mxu0 0.0
    %2230 = vmatmul.mubr.f32.gmra.mrb[0].mxu0 %v1803
    %v2231 = vpop.f32.mrb[0].mxu0
    %v2232 = vadd.f32 0.0, %v2231
    %v2233 = vpop.f32.mrb[0].mxu0
    %2234 = vmatprep.mubr.f32.mxu0 0.0
    %2235 = vmatmul.mubr.f32.gmra.mrb[0].mxu0 %v1806
    %v2236 = vpop.f32.mrb[0].mxu0
    %v2237 = vadd.f32 0.0, %v2236
    %v2238 = vpop.f32.mrb[0].mxu0
    %2239 = vmatprep.mubr.f32.mxu0 0.0
    %2240 = vmatmul.mubr.f32.gmra.mrb[0].mxu0 %v1809
    %v2241 = vpop.f32.mrb[0].mxu0
    %v2242 = vadd.f32 0.0, %v2241
    %v2243 = vpop.f32.mrb[0].mxu0
    %2244 = vmatprep.mubr.f32.mxu0 0.0
    %2245 = vmatmul.mubr.f32.gmra.mrb[0].mxu0 %v1812
    %v2246 = vpop.f32.mrb[0].mxu0
    %v2247 = vadd.f32 0.0, %v2246
    %v2248 = vpop.f32.mrb[0].mxu0
    %2249 = vmatprep.mubr.f32.mxu0 0.0
    %2250 = vmatmul.mubr.f32.gmra.mrb[0].mxu0 %v1815
    %v2251 = vpop.f32.mrb[0].mxu0
    %v2252 = vadd.f32 0.0, %v2251
    %v2253 = vpop.f32.mrb[0].mxu0
    %2254 = vmatprep.mubr.f32.mxu0 0.0
    %2255 = vmatmul.mubr.f32.gmra.mrb[0].mxu0 %v1818
    %v2256 = vpop.f32.mrb[0].mxu0
    %v2257 = vadd.f32 0.0, %v2256
    %v2258 = vpop.f32.mrb[0].mxu0
    %2259 = vmatprep.mubr.f32.mxu0 0.0
    %2260 = vmatmul.mubr.f32.gmra.mrb[0].mxu0 %v1821
    %v2261 = vpop.f32.mrb[0].mxu0
    %v2262 = vadd.f32 0.0, %v2261
    %v2263 = vpop.f32.mrb[0].mxu0
    %2264 = vmatprep.mubr.f32.mxu0 0.0
    %2265 = vmatmul.mubr.f32.gmra.mrb[0].mxu0 %v1824
    %v2266 = vpop.f32.mrb[0].mxu0
    %v2267 = vadd.f32 0.0, %v2266
    %v2268 = vpop.f32.mrb[0].mxu0
    %2269 = vdwg.mxu0
    %v2270 = vadd.f32 %v1147, %v1897
    %v2271 = vadd.f32 %v1152, %v1902
    %v2272 = vadd.f32 %v1157, %v1907
    %v2273 = vadd.f32 %v1162, %v1912
    %v2274 = vadd.f32 %v1167, %v1917
    %v2275 = vadd.f32 %v1172, %v1922
    %v2276 = vadd.f32 %v1177, %v1927
    %v2277 = vadd.f32 %v1182, %v1932
    %v2278 = vadd.f32 %v1187, %v1937
    %v2279 = vadd.f32 %v1192, %v1942
    %v2280 = vadd.f32 %v1197, %v1947
    %v2281 = vadd.f32 %v1202, %v1952
    %v2282 = vadd.f32 %v1207, %v1957
    %v2283 = vadd.f32 %v1212, %v1962
    %v2284 = vadd.f32 %v1217, %v1967
    %v2285 = vadd.f32 %v1222, %v1972
    %v2286 = vadd.f32 %v1227, %v1977
    %v2287 = vadd.f32 %v1232, %v1982
    %v2288 = vadd.f32 %v1237, %v1987
    %v2289 = vadd.f32 %v1242, %v1992
    %v2290 = vadd.f32 %v1247, %v1997
    %v2291 = vadd.f32 %v1252, %v2002
    %v2292 = vadd.f32 %v1257, %v2007
    %v2293 = vadd.f32 %v1262, %v2012
    %v2294 = vadd.f32 %v1267, %v2017
    %v2295 = vadd.f32 %v1272, %v2022
    %v2296 = vadd.f32 %v1277, %v2027
    %v2297 = vadd.f32 %v1282, %v2032
    %v2298 = vadd.f32 %v1287, %v2037
    %v2299 = vadd.f32 %v1292, %v2042
    %v2300 = vadd.f32 %v1297, %v2047
    %v2301 = vadd.f32 %v1302, %v2052
    %v2302 = vadd.f32 %v1307, %v2057
    %v2303 = vadd.f32 %v1312, %v2062
    %v2304 = vadd.f32 %v1317, %v2067
    %v2305 = vadd.f32 %v1322, %v2072
    %v2306 = vadd.f32 %v1327, %v2077
    %v2307 = vadd.f32 %v1332, %v2082
    %v2308 = vadd.f32 %v1337, %v2087
    %v2309 = vadd.f32 %v1342, %v2092
    %v2310 = vadd.f32 %v1347, %v2097
    %v2311 = vadd.f32 %v1352, %v2102
    %v2312 = vadd.f32 %v1357, %v2107
    %v2313 = vadd.f32 %v1362, %v2112
    %v2314 = vadd.f32 %v1367, %v2117
    %v2315 = vadd.f32 %v1372, %v2122
    %v2316 = vadd.f32 %v1377, %v2127
    %v2317 = vadd.f32 %v1382, %v2132
    %v2318 = vadd.f32 %v1387, %v2137
    %v2319 = vadd.f32 %v1392, %v2142
    %v2320 = vadd.f32 %v1397, %v2147
    %v2321 = vadd.f32 %v1402, %v2152
    %v2322 = vadd.f32 %v1407, %v2157
    %v2323 = vadd.f32 %v1412, %v2162
    %v2324 = vadd.f32 %v1417, %v2167
    %v2325 = vadd.f32 %v1422, %v2172
    %v2326 = vadd.f32 %v1427, %v2177
    %v2327 = vadd.f32 %v1432, %v2182
    %v2328 = vadd.f32 %v1437, %v2187
    %v2329 = vadd.f32 %v1442, %v2192
    %v2330 = vadd.f32 %v1447, %v2197
    %v2331 = vadd.f32 %v1452, %v2202
    %v2332 = vadd.f32 %v1457, %v2207
    %v2333 = vadd.f32 %v1462, %v2212
    %v2334 = vadd.f32 %v1467, %v2217
    %v2335 = vadd.f32 %v1472, %v2222
    %v2336 = vadd.f32 %v1477, %v2227
    %v2337 = vadd.f32 %v1482, %v2232
    %v2338 = vadd.f32 %v1487, %v2237
    %v2339 = vadd.f32 %v1492, %v2242
    %v2340 = vadd.f32 %v1497, %v2247
    %v2341 = vadd.f32 %v1502, %v2252
    %v2342 = vadd.f32 %v1507, %v2257
    %v2343 = vadd.f32 %v1512, %v2262
    %v2344 = vadd.f32 %v1517, %v2267
    %v2345 = vmax.f32 %v2270, 0.0
    %v2346 = vmax.f32 %v2271, 0.0
    %v2347 = vmax.f32 %v2272, 0.0
    %v2348 = vmax.f32 %v2273, 0.0
    %v2349 = vmax.f32 %v2274, 0.0
    %v2350 = vmax.f32 %v2275, 0.0
    %v2351 = vmax.f32 %v2276, 0.0
    %v2352 = vmax.f32 %v2277, 0.0
    %v2353 = vmax.f32 %v2278, 0.0
    %v2354 = vmax.f32 %v2279, 0.0
    %v2355 = vmax.f32 %v2280, 0.0
    %v2356 = vmax.f32 %v2281, 0.0
    %v2357 = vmax.f32 %v2282, 0.0
    %v2358 = vmax.f32 %v2283, 0.0
    %v2359 = vmax.f32 %v2284, 0.0
    %v2360 = vmax.f32 %v2285, 0.0
    %v2361 = vmax.f32 %v2286, 0.0
    %v2362 = vmax.f32 %v2287, 0.0
    %v2363 = vmax.f32 %v2288, 0.0
    %v2364 = vmax.f32 %v2289, 0.0
    %v2365 = vmax.f32 %v2290, 0.0
    %v2366 = vmax.f32 %v2291, 0.0
    %v2367 = vmax.f32 %v2292, 0.0
    %v2368 = vmax.f32 %v2293, 0.0
    %v2369 = vmax.f32 %v2294, 0.0
    %v2370 = vmax.f32 %v2295, 0.0
    %v2371 = vmax.f32 %v2296, 0.0
    %v2372 = vmax.f32 %v2297, 0.0
    %v2373 = vmax.f32 %v2298, 0.0
    %v2374 = vmax.f32 %v2299, 0.0
    %v2375 = vmax.f32 %v2300, 0.0
    %v2376 = vmax.f32 %v2301, 0.0
    %v2377 = vmax.f32 %v2302, 0.0
    %v2378 = vmax.f32 %v2303, 0.0
    %v2379 = vmax.f32 %v2304, 0.0
    %v2380 = vmax.f32 %v2305, 0.0
    %v2381 = vmax.f32 %v2306, 0.0
    %v2382 = vmax.f32 %v2307, 0.0
    %v2383 = vmax.f32 %v2308, 0.0
    %v2384 = vmax.f32 %v2309, 0.0
    %v2385 = vmax.f32 %v2310, 0.0
    %v2386 = vmax.f32 %v2311, 0.0
    %v2387 = vmax.f32 %v2312, 0.0
    %v2388 = vmax.f32 %v2313, 0.0
    %v2389 = vmax.f32 %v2314, 0.0
    %v2390 = vmax.f32 %v2315, 0.0
    %v2391 = vmax.f32 %v2316, 0.0
    %v2392 = vmax.f32 %v2317, 0.0
    %v2393 = vmax.f32 %v2318, 0.0
    %v2394 = vmax.f32 %v2319, 0.0
    %v2395 = vmax.f32 %v2320, 0.0
    %v2396 = vmax.f32 %v2321, 0.0
    %v2397 = vmax.f32 %v2322, 0.0
    %v2398 = vmax.f32 %v2323, 0.0
    %v2399 = vmax.f32 %v2324, 0.0
    %v2400 = vmax.f32 %v2325, 0.0
    %v2401 = vmax.f32 %v2326, 0.0
    %v2402 = vmax.f32 %v2327, 0.0
    %v2403 = vmax.f32 %v2328, 0.0
    %v2404 = vmax.f32 %v2329, 0.0
    %v2405 = vmax.f32 %v2330, 0.0
    %v2406 = vmax.f32 %v2331, 0.0
    %v2407 = vmax.f32 %v2332, 0.0
    %v2408 = vmax.f32 %v2333, 0.0
    %v2409 = vmax.f32 %v2334, 0.0
    %v2410 = vmax.f32 %v2335, 0.0
    %v2411 = vmax.f32 %v2336, 0.0
    %v2412 = vmax.f32 %v2337, 0.0
    %v2413 = vmax.f32 %v2338, 0.0
    %v2414 = vmax.f32 %v2339, 0.0
    %v2415 = vmax.f32 %v2340, 0.0
    %v2416 = vmax.f32 %v2341, 0.0
    %v2417 = vmax.f32 %v2342, 0.0
    %v2418 = vmax.f32 %v2343, 0.0
    %v2419 = vmax.f32 %v2344, 0.0
    %v2420 = vld [vmem:[%s6] sm:$0x1]
    %s2421 = sld [smem:[#allocation2]]
    %v2422 = vstv %s2421
    %v2424 = vsel %vm189, %v2420, 0
    %v2427 = vsel %vm189, %v2345, 0
    %v2430 = vsel %vm189, %v2346, 0
    %v2433 = vsel %vm189, %v2347, 0
    %v2436 = vsel %vm189, %v2348, 0
    %v2439 = vsel %vm189, %v2349, 0
    %v2442 = vsel %vm189, %v2350, 0
    %v2445 = vsel %vm189, %v2351, 0
    %v2448 = vsel %vm189, %v2352, 0
    %v2451 = vsel %vm189, %v2353, 0
    %v2454 = vsel %vm189, %v2354, 0
    %v2457 = vsel %vm189, %v2355, 0
    %v2460 = vsel %vm189, %v2356, 0
    %v2463 = vsel %vm189, %v2357, 0
    %v2466 = vsel %vm189, %v2358, 0
    %v2469 = vsel %vm189, %v2359, 0
    %v2472 = vsel %vm189, %v2360, 0
    %v2475 = vsel %vm189, %v2361, 0
    %v2478 = vsel %vm189, %v2362, 0
    %v2481 = vsel %vm189, %v2363, 0
    %v2484 = vsel %vm189, %v2364, 0
    %v2487 = vsel %vm189, %v2365, 0
    %v2490 = vsel %vm189, %v2366, 0
    %v2493 = vsel %vm189, %v2367, 0
    %v2496 = vsel %vm189, %v2368, 0
    %v2499 = vsel %vm189, %v2369, 0
    %v2502 = vsel %vm189, %v2370, 0
    %v2505 = vsel %vm189, %v2371, 0
    %v2508 = vsel %vm189, %v2372, 0
    %v2511 = vsel %vm189, %v2373, 0
    %v2514 = vsel %vm189, %v2374, 0
    %v2517 = vsel %vm189, %v2375, 0
    %v2520 = vsel %vm189, %v2376, 0
    %v2523 = vsel %vm189, %v2377, 0
    %v2526 = vsel %vm189, %v2378, 0
    %v2529 = vsel %vm189, %v2379, 0
    %v2532 = vsel %vm189, %v2380, 0
    %v2535 = vsel %vm189, %v2381, 0
    %v2538 = vsel %vm189, %v2382, 0
    %v2541 = vsel %vm189, %v2383, 0
    %v2544 = vsel %vm189, %v2384, 0
    %v2547 = vsel %vm189, %v2385, 0
    %v2550 = vsel %vm189, %v2386, 0
    %v2553 = vsel %vm189, %v2387, 0
    %v2556 = vsel %vm189, %v2388, 0
    %v2559 = vsel %vm189, %v2389, 0
    %v2562 = vsel %vm189, %v2390, 0
    %v2565 = vsel %vm189, %v2391, 0
    %v2568 = vsel %vm189, %v2392, 0
    %v2571 = vsel %vm189, %v2393, 0
    %v2574 = vsel %vm189, %v2394, 0
    %v2577 = vsel %vm189, %v2395, 0
    %v2580 = vsel %vm189, %v2396, 0
    %v2583 = vsel %vm189, %v2397, 0
    %v2586 = vsel %vm189, %v2398, 0
    %v2589 = vsel %vm189, %v2399, 0
    %v2592 = vsel %vm189, %v2400, 0
    %v2595 = vsel %vm189, %v2401, 0
    %v2598 = vsel %vm189, %v2402, 0
    %v2601 = vsel %vm189, %v2403, 0
    %v2604 = vsel %vm189, %v2404, 0
    %v2607 = vsel %vm189, %v2405, 0
    %v2610 = vsel %vm189, %v2406, 0
    %v2613 = vsel %vm189, %v2407, 0
    %v2616 = vsel %vm189, %v2408, 0
    %v2619 = vsel %vm189, %v2409, 0
    %v2622 = vsel %vm189, %v2410, 0
    %v2625 = vsel %vm189, %v2411, 0
    %v2628 = vsel %vm189, %v2412, 0
    %v2631 = vsel %vm189, %v2413, 0
    %v2634 = vsel %vm189, %v2414, 0
    %v2637 = vsel %vm189, %v2415, 0
    %v2640 = vsel %vm189, %v2416, 0
    %v2643 = vsel %vm189, %v2417, 0
    %v2646 = vsel %vm189, %v2418, 0
    %v2649 = vsel %vm189, %v2419, 0
    %2651 = vmatprep.subr.mxu0 0.0
    %2652 = vmatpush1.xpose.msra.mxu0 %v2427
    %2653 = vmatprep.subr.mxu0 0.0
    %2654 = vmatpush1.xpose.msra.mxu0 %v2430
    %2655 = vmatprep.subr.mxu0 0.0
    %2656 = vmatpush1.xpose.msra.mxu0 %v2433
    %2657 = vmatprep.subr.mxu0 0.0
    %2658 = vmatpush1.xpose.msra.mxu0 %v2436
    %2659 = vmatprep.subr.mxu0 0.0
    %2660 = vmatpush1.xpose.msra.mxu0 %v2439
    %2661 = vmatprep.subr.mxu0 0.0
    %2662 = vmatpush1.xpose.msra.mxu0 %v2442
    %2663 = vmatprep.subr.mxu0 0.0
    %2664 = vmatpush1.xpose.msra.mxu0 %v2445
    %2665 = vmatprep.subr.mxu0 0.0
    %2666 = vmatpush1.xpose.msra.mxu0 %v2448
    %2667 = vmatprep.subr.mxu0 0.0
    %2668 = vmatpush1.xpose.msra.mxu0 %v2451
    %2669 = vmatprep.subr.mxu0 0.0
    %2670 = vmatpush1.xpose.msra.mxu0 %v2454
    %2671 = vmatprep.subr.mxu0 0.0
    %2672 = vmatpush1.xpose.msra.mxu0 %v2457
    %2673 = vmatprep.subr.mxu0 0.0
    %2674 = vmatpush1.xpose.msra.mxu0 %v2460
    %2675 = vmatprep.subr.mxu0 0.0
    %2676 = vmatpush1.xpose.msra.mxu0 %v2463
    %2677 = vmatprep.subr.mxu0 0.0
    %2678 = vmatpush1.xpose.msra.mxu0 %v2466
    %2679 = vmatprep.subr.mxu0 0.0
    %2680 = vmatpush1.xpose.msra.mxu0 %v2469
    %2681 = vmatprep.subr.mxu0 0.0
    %2682 = vmatpush1.xpose.msra.mxu0 %v2472
    %2683 = vmatprep.subr.mxu0 0.0
    %2684 = vmatpush1.xpose.msra.mxu0 %v2475
    %2685 = vmatprep.subr.mxu0 0.0
    %2686 = vmatpush1.xpose.msra.mxu0 %v2478
    %2687 = vmatprep.subr.mxu0 0.0
    %2688 = vmatpush1.xpose.msra.mxu0 %v2481
    %2689 = vmatprep.subr.mxu0 0.0
    %2690 = vmatpush1.xpose.msra.mxu0 %v2484
    %2691 = vmatprep.subr.mxu0 0.0
    %2692 = vmatpush1.xpose.msra.mxu0 %v2487
    %2693 = vmatprep.subr.mxu0 0.0
    %2694 = vmatpush1.xpose.msra.mxu0 %v2490
    %2695 = vmatprep.subr.mxu0 0.0
    %2696 = vmatpush1.xpose.msra.mxu0 %v2493
    %2697 = vmatprep.subr.mxu0 0.0
    %2698 = vmatpush1.xpose.msra.mxu0 %v2496
    %2699 = vmatprep.subr.mxu0 0.0
    %2700 = vmatpush1.xpose.msra.mxu0 %v2499
    %2701 = vmatprep.subr.mxu0 0.0
    %2702 = vmatpush1.xpose.msra.mxu0 %v2502
    %2703 = vmatprep.subr.mxu0 0.0
    %2704 = vmatpush1.xpose.msra.mxu0 %v2505
    %2705 = vmatprep.subr.mxu0 0.0
    %2706 = vmatpush1.xpose.msra.mxu0 %v2508
    %2707 = vmatprep.subr.mxu0 0.0
    %2708 = vmatpush1.xpose.msra.mxu0 %v2511
    %2709 = vmatprep.subr.mxu0 0.0
    %2710 = vmatpush1.xpose.msra.mxu0 %v2514
    %2711 = vmatprep.subr.mxu0 0.0
    %2712 = vmatpush1.xpose.msra.mxu0 %v2517
    %2713 = vmatprep.subr.mxu0 0.0
    %2714 = vmatpush1.xpose.msra.mxu0 %v2520
    %2715 = vmatprep.mubr.f32.mxu0 0.0
    %2716 = vmatmul.mubr.f32.gmra.mrb[0].mxu0 %v2424
    %v2717 = vpop.f32.mrb[0].mxu0
    %v2718 = vadd.f32 %v2422, %v2717
    %v2719 = vpop.f32.mrb[0].mxu0
    %v2720 = vadd.f32 %v2422, %v2719
    %2721 = vdwg.mxu0
    %2722 = vmatprep.subr.mxu0 0.0
    %2723 = vmatpush1.xpose.msra.mxu0 %v2523
    %2724 = vmatprep.subr.mxu0 0.0
    %2725 = vmatpush1.xpose.msra.mxu0 %v2526
    %2726 = vmatprep.subr.mxu0 0.0
    %2727 = vmatpush1.xpose.msra.mxu0 %v2529
    %2728 = vmatprep.subr.mxu0 0.0
    %2729 = vmatpush1.xpose.msra.mxu0 %v2532
    %2730 = vmatprep.subr.mxu0 0.0
    %2731 = vmatpush1.xpose.msra.mxu0 %v2535
    %2732 = vmatprep.subr.mxu0 0.0
    %2733 = vmatpush1.xpose.msra.mxu0 %v2538
    %2734 = vmatprep.subr.mxu0 0.0
    %2735 = vmatpush1.xpose.msra.mxu0 %v2541
    %2736 = vmatprep.subr.mxu0 0.0
    %2737 = vmatpush1.xpose.msra.mxu0 %v2544
    %2738 = vmatprep.subr.mxu0 0.0
    %2739 = vmatpush1.xpose.msra.mxu0 %v2547
    %2740 = vmatprep.subr.mxu0 0.0
    %2741 = vmatpush1.xpose.msra.mxu0 %v2550
    %2742 = vmatprep.subr.mxu0 0.0
    %2743 = vmatpush1.xpose.msra.mxu0 %v2553
    %2744 = vmatprep.subr.mxu0 0.0
    %2745 = vmatpush1.xpose.msra.mxu0 %v2556
    %2746 = vmatprep.subr.mxu0 0.0
    %2747 = vmatpush1.xpose.msra.mxu0 %v2559
    %2748 = vmatprep.subr.mxu0 0.0
    %2749 = vmatpush1.xpose.msra.mxu0 %v2562
    %2750 = vmatprep.subr.mxu0 0.0
    %2751 = vmatpush1.xpose.msra.mxu0 %v2565
    %2752 = vmatprep.subr.mxu0 0.0
    %2753 = vmatpush1.xpose.msra.mxu0 %v2568
    %2754 = vmatprep.subr.mxu0 0.0
    %2755 = vmatpush1.xpose.msra.mxu0 %v2571
    %2756 = vmatprep.subr.mxu0 0.0
    %2757 = vmatpush1.xpose.msra.mxu0 %v2574
    %2758 = vmatprep.subr.mxu0 0.0
    %2759 = vmatpush1.xpose.msra.mxu0 %v2577
    %2760 = vmatprep.subr.mxu0 0.0
    %2761 = vmatpush1.xpose.msra.mxu0 %v2580
    %2762 = vmatprep.subr.mxu0 0.0
    %2763 = vmatpush1.xpose.msra.mxu0 %v2583
    %2764 = vmatprep.subr.mxu0 0.0
    %2765 = vmatpush1.xpose.msra.mxu0 %v2586
    %2766 = vmatprep.subr.mxu0 0.0
    %2767 = vmatpush1.xpose.msra.mxu0 %v2589
    %2768 = vmatprep.subr.mxu0 0.0
    %2769 = vmatpush1.xpose.msra.mxu0 %v2592
    %2770 = vmatprep.subr.mxu0 0.0
    %2771 = vmatpush1.xpose.msra.mxu0 %v2595
    %2772 = vmatprep.subr.mxu0 0.0
    %2773 = vmatpush1.xpose.msra.mxu0 %v2598
    %2774 = vmatprep.subr.mxu0 0.0
    %2775 = vmatpush1.xpose.msra.mxu0 %v2601
    %2776 = vmatprep.subr.mxu0 0.0
    %2777 = vmatpush1.xpose.msra.mxu0 %v2604
    %2778 = vmatprep.subr.mxu0 0.0
    %2779 = vmatpush1.xpose.msra.mxu0 %v2607
    %2780 = vmatprep.subr.mxu0 0.0
    %2781 = vmatpush1.xpose.msra.mxu0 %v2610
    %2782 = vmatprep.subr.mxu0 0.0
    %2783 = vmatpush1.xpose.msra.mxu0 %v2613
    %2784 = vmatprep.subr.mxu0 0.0
    %2785 = vmatpush1.xpose.msra.mxu0 %v2616
    %2786 = vmatprep.mubr.f32.mxu0 0.0
    %2787 = vmatmul.mubr.f32.gmra.mrb[0].mxu0 %v2424
    %v2788 = vpop.f32.mrb[0].mxu0
    %v2789 = vadd.f32 %v2422, %v2788
    %v2790 = vpop.f32.mrb[0].mxu0
    %v2791 = vadd.f32 %v2422, %v2790
    %2792 = vdwg.mxu0
    %2793 = vmatprep.subr.mxu0 0.0
    %2794 = vmatpush1.xpose.msra.mxu0 %v2619
    %2795 = vmatprep.subr.mxu0 0.0
    %2796 = vmatpush1.xpose.msra.mxu0 %v2622
    %2797 = vmatprep.subr.mxu0 0.0
    %2798 = vmatpush1.xpose.msra.mxu0 %v2625
    %2799 = vmatprep.subr.mxu0 0.0
    %2800 = vmatpush1.xpose.msra.mxu0 %v2628
    %2801 = vmatprep.subr.mxu0 0.0
    %2802 = vmatpush1.xpose.msra.mxu0 %v2631
    %2803 = vmatprep.subr.mxu0 0.0
    %2804 = vmatpush1.xpose.msra.mxu0 %v2634
    %2805 = vmatprep.subr.mxu0 0.0
    %2806 = vmatpush1.xpose.msra.mxu0 %v2637
    %2807 = vmatprep.subr.mxu0 0.0
    %2808 = vmatpush1.xpose.msra.mxu0 %v2640
    %2809 = vmatprep.subr.mxu0 0.0
    %2810 = vmatpush1.xpose.msra.mxu0 %v2643
    %2811 = vmatprep.subr.mxu0 0.0
    %2812 = vmatpush1.xpose.msra.mxu0 %v2646
    %2813 = vmatprep.subr.mxu0 0.0
    %2814 = vmatpush1.xpose.msra.mxu0 %v2649
    %2815 = vmatprep.subr.mxu0 0.0
    %2816 = vmatpush1.xpose.msra.mxu0 0.0
    %2817 = vmatprep.subr.mxu0 0.0
    %2818 = vmatpush1.xpose.msra.mxu0 0.0
    %2819 = vmatprep.subr.mxu0 0.0
    %2820 = vmatpush1.xpose.msra.mxu0 0.0
    %2821 = vmatprep.subr.mxu0 0.0
    %2822 = vmatpush1.xpose.msra.mxu0 0.0
    %2823 = vmatprep.subr.mxu0 0.0
    %2824 = vmatpush1.xpose.msra.mxu0 0.0
    %2825 = vmatprep.subr.mxu0 0.0
    %2826 = vmatpush1.xpose.msra.mxu0 0.0
    %2827 = vmatprep.subr.mxu0 0.0
    %2828 = vmatpush1.xpose.msra.mxu0 0.0
    %2829 = vmatprep.subr.mxu0 0.0
    %2830 = vmatpush1.xpose.msra.mxu0 0.0
    %2831 = vmatprep.subr.mxu0 0.0
    %2832 = vmatpush1.xpose.msra.mxu0 0.0
    %2833 = vmatprep.subr.mxu0 0.0
    %2834 = vmatpush1.xpose.msra.mxu0 0.0
    %2835 = vmatprep.subr.mxu0 0.0
    %2836 = vmatpush1.xpose.msra.mxu0 0.0
    %2837 = vmatprep.subr.mxu0 0.0
    %2838 = vmatpush1.xpose.msra.mxu0 0.0
    %2839 = vmatprep.subr.mxu0 0.0
    %2840 = vmatpush1.xpose.msra.mxu0 0.0
    %2841 = vmatprep.subr.mxu0 0.0
    %2842 = vmatpush1.xpose.msra.mxu0 0.0
    %2843 = vmatprep.subr.mxu0 0.0
    %2844 = vmatpush1.xpose.msra.mxu0 0.0
    %2845 = vmatprep.subr.mxu0 0.0
    %2846 = vmatpush1.xpose.msra.mxu0 0.0
    %2847 = vmatprep.subr.mxu0 0.0
    %2848 = vmatpush1.xpose.msra.mxu0 0.0
    %2849 = vmatprep.subr.mxu0 0.0
    %2850 = vmatpush1.xpose.msra.mxu0 0.0
    %2851 = vmatprep.subr.mxu0 0.0
    %2852 = vmatpush1.xpose.msra.mxu0 0.0
    %2853 = vmatprep.subr.mxu0 0.0
    %2854 = vmatpush1.xpose.msra.mxu0 0.0
    %2855 = vmatprep.subr.mxu0 0.0
    %2856 = vmatpush1.xpose.msra.mxu0 0.0
    %2857 = vmatprep.mubr.f32.mxu0 0.0
    %2858 = vmatmul.mubr.f32.gmra.mrb[0].mxu0 %v2424
    %v2859 = vpop.f32.mrb[0].mxu0
    %v2860 = vadd.f32 %v2422, %v2859
    %v2861 = vpop.f32.mrb[0].mxu0
    %2862 = vdwg.mxu0
    %v2868 = vcombine.low %v2718, %v2720
    %v2869 = vcombine.low %v2789, %v2791
    %v2871 = vunpack.c.l.s4 1966171168
    %v2872 = vunpack.c.0.s8 %v2871
    %v2873 = vlaneseq
    %v2874 = vshrl.u32 %v2873, 7
    %v2875 = vsub.s32 %v2872, %v2874
    %v2876 = vrot.slane %v2868, %v2875
    %v2878 = vunpack.c.l.s4 1966171168
    %v2879 = vunpack.c.0.s8 %v2878
    %v2880 = vlaneseq
    %v2881 = vshrl.u32 %v2880, 7
    %v2882 = vsub.s32 %v2879, %v2881
    %v2883 = vrot.slane %v2869, %v2882
    %v2885 = vunpack.c.l.s4 1966171168
    %v2886 = vunpack.c.0.s8 %v2885
    %v2887 = vlaneseq
    %v2888 = vshrl.u32 %v2887, 7
    %v2889 = vsub.s32 %v2886, %v2888
    %v2890 = vrot.slane %v2860, %v2889
    %v2891 = vcombine.low %v2876, %v2883
    %v2893 = vunpack.c.l.s4 1966171168
    %v2894 = vunpack.c.0.s8 %v2893
    %v2895 = vlaneseq
    %v2896 = vshrl.u32 %v2895, 7
    %v2897 = vsub.s32 %v2894, %v2896
    %v2898 = vrot.slane %v2891, %v2897
    %v2900 = vunpack.c.l.s4 1966171168
    %v2901 = vunpack.c.0.s8 %v2900
    %v2902 = vlaneseq
    %v2903 = vshrl.u32 %v2902, 7
    %v2904 = vsub.s32 %v2901, %v2903
    %v2905 = vrot.slane %v2890, %v2904
    %v2906 = vcombine.low %v2898, %v2905
    %v2908 = vlaneseq
    %vm2909 = vcmp.ge.s32.totalorder %v2908, 0
    %vm2910 = vcmp.lt.s32.totalorder %v2908, 600
    %vm2911 = vmand %vm2909, %vm2910
    %2912 = vst.msk [vmem:[#allocation3] sm:$0x1f] %vm2911, %v2906
    // Predicated region
    $region34: #{sequential_scorer_batched.1} parent=1 // pred_check
      _
    $region35: #{sequential_scorer_batched.1} parent=1 // pred_check_branch
      %2914 = sbr.rel (0) target = $region37
    $region36: #{sequential_scorer_batched.1} parent=1 // pred_region
      %s2916 = ssub.s32 80, 80
      %2917 = vsyncadd [#allocation4], %s2916
      %s2919 = sshll.u32 [#allocation3], 4
      %s2920 = int_to_ptr.vmem [resolvable:$true] %s2919
      %2922 = dma.vmem_to_hbm [thread:$0]  %s2920, 80, %s8, [#allocation4]
    $region37: #{sequential_scorer_batched.1} parent=1 // pred_fallthru
      _
    // Predicated region
    $region38: #{sequential_scorer_batched.1} parent=1 // pred_check
      _
    $region39: #{sequential_scorer_batched.1} parent=1 // pred_check_branch
      %2924 = sbr.rel (0) target = $region41
    $region40: #{sequential_scorer_batched.1} parent=1 // pred_region
      %2925 = dma.done [#allocation4], 80
    $region41: #{sequential_scorer_batched.1} parent=1 // pred_fallthru
      _
    %2926 = vsyncpa [#allocation4], 1

</llo_original>
